<compile_context>
chip_gen: v5e
topology: v5e:2x2
jax: 0.10.0
libtpu: 0.0.40
codegen_flags: <defaults>
</compile_context>

<pallas_src>
import functools

import jax
import jax.numpy as jnp
from jax.experimental import pallas as pl
from jax.experimental.pallas import tpu as pltpu


def _transition_kernel(keep_threshold, x_ref, scale_ref, bias_ref, w_ref, *rest):
    """One (image, output-row-tile) grid step.

    x_ref     : (THO, 2, WO, 2, C)  input rows for this tile, NHWC parity view
    scale_ref : (1, C)              folded BatchNorm scale (f32)
    bias_ref  : (1, C)              folded BatchNorm bias  (f32)
    w_ref     : (C, Cout)           1x1 conv weight, bf16; 0.25 (avg-pool) and
                                    1/(1-p) (dropout survivor scale) pre-folded
    rnd_ref   : (THO*WO, Cout)      uint32 random bits (only when dropout > 0)
    out_ref   : (THO*WO, Cout)      output block, channels on the lane axis
    """
    if keep_threshold is None:
        (out_ref,) = rest
        rnd_ref = None
    else:
        rnd_ref, out_ref = rest

    scale = scale_ref[0].astype(jnp.float32)     # (C,)
    bias = bias_ref[0].astype(jnp.float32)       # (C,)

    def bn_relu(t):
        # Folded BatchNorm + ReLU, elementwise in f32 on the VPU.
        return jnp.maximum(t.astype(jnp.float32) * scale + bias, 0.0)

    # 2x2 average pool as a VPU reduce over the four parity slices
    # (the 1/4 factor lives in w_ref).  Each input element is touched once.
    pooled = (bn_relu(x_ref[:, 0, :, 0, :]) + bn_relu(x_ref[:, 0, :, 1, :]) +
              bn_relu(x_ref[:, 1, :, 0, :]) + bn_relu(x_ref[:, 1, :, 1, :]))
    tho, wo, c = pooled.shape                    # static

    # 1x1 conv on the pooled activations: one bf16 MXU matmul, f32 accumulate.
    acts = pooled.reshape(tho * wo, c).astype(jnp.bfloat16)
    z = jnp.dot(acts, w_ref[...], preferred_element_type=jnp.float32)

    if keep_threshold is not None:
        # F.dropout: zero with probability p.  Survivor rescale is in w_ref.
        keep = rnd_ref[...] >= jnp.uint32(keep_threshold)
        z = jnp.where(keep, z, 0.0)

    out_ref[...] = z.astype(out_ref.dtype)


def _largest_divisor_at_most(n, cap):
    for d in range(min(n, cap), 0, -1):
        if n % d == 0:
            return d
    return 1


def transition_forward_nhwc(x, params, dropout=0.0, rng=None, tile_rows=8):
    """_Transition forward, channels-last (NHWC) in / out.  Preferred entry
    point: in a channels-last pipeline there is no layout round-trip at all."""
    gamma, beta, run_mean, run_var, conv_w = params   # conv_w: (Cout, Cin, 1, 1)
    N, H, W, C = x.shape
    Cout = conv_w.shape[0]
    assert H % 2 == 0 and W % 2 == 0, "AvgPool2d(2, 2) needs even H and W"
    HO, WO = H // 2, W // 2
    eps = 1e-5

    # Fold inference-mode BatchNorm into per-channel scale / bias.
    # TODO(synk): training-mode BatchNorm (batch statistics) is not implemented.
    inv_std = jax.lax.rsqrt(run_var.astype(jnp.float32) + eps)
    g32 = gamma.astype(jnp.float32)
    scale = (g32 * inv_std).reshape(1, C)
    bias = (beta.astype(jnp.float32) -
            run_mean.astype(jnp.float32) * g32 * inv_std).reshape(1, C)

    # 1x1 conv weight as (Cin, Cout); fold the 0.25 avg-pool factor and (when
    # dropout is on) the 1/(1-p) survivor scale.  bf16 for the MXU.
    w = conv_w[:, :, 0, 0].T.astype(jnp.float32) * 0.25
    p = float(dropout)
    if p > 0.0:
        w = w / (1.0 - p)
    w = w.astype(jnp.bfloat16)

    # Spatial row tiling: THO output rows per grid step.  Bounds the VMEM
    # block (mandatory headroom on v7x's 64 MiB) and gives extra parallel
    # grid steps; raise tile_rows / vmem_limit_bytes on v5e/v6e if desired.
    tho = _largest_divisor_at_most(HO, tile_rows)
    grid = (N, HO // tho)
    s_tile = tho * WO

    # Free reshape exposing the 2x2 pooling windows as size-2 parity axes.
    x6 = x.reshape(N, HO, 2, WO, 2, C)

    in_specs = [
        pl.BlockSpec((None, tho, 2, WO, 2, C), lambda n, t: (n, t, 0, 0, 0, 0)),
        pl.BlockSpec((1, C), lambda n, t: (0, 0)),
        pl.BlockSpec((1, C), lambda n, t: (0, 0)),
        pl.BlockSpec((C, Cout), lambda n, t: (0, 0)),
    ]
    inputs = [x6, scale, bias, w]

    keep_threshold = None
    if p > 0.0:
        if rng is None:
            rng = jax.random.PRNGKey(0)
        # Drop iff bits < p * 2^32 (unbiased integer threshold test).
        keep_threshold = min(int(round(p * 2.0 ** 32)), 2 ** 32 - 1)
        rnd = jax.random.bits(rng, (N, HO * WO, Cout), dtype=jnp.uint32)
        in_specs.append(
            pl.BlockSpec((None, s_tile, Cout), lambda n, t: (n, t, 0)))
        inputs.append(rnd)

    out = pl.pallas_call(
        functools.partial(_transition_kernel, keep_threshold),
        out_shape=jax.ShapeDtypeStruct((N, HO * WO, Cout), x.dtype),
        grid=grid,
        in_specs=in_specs,
        out_specs=pl.BlockSpec((None, s_tile, Cout), lambda n, t: (n, t, 0)),
        compiler_params=pltpu.CompilerParams(
            dimension_semantics=("parallel", "parallel"),
            vmem_limit_bytes=64 * 1024 * 1024),
    )(*inputs)

    return out.reshape(N, HO, WO, Cout)


def transition_forward_nchw(x_nchw, params, dropout=0.0, rng=None, tile_rows=8):
    """NCHW adapter matching the PyTorch module interface.  In an end-to-end
    channels-last DenseNet call transition_forward_nhwc directly and skip
    these two transposes (the only extra HBM passes left)."""
    x_nhwc = jnp.transpose(x_nchw, (0, 2, 3, 1))
    out_nhwc = transition_forward_nhwc(x_nhwc, params, dropout, rng, tile_rows)
    return jnp.transpose(out_nhwc, (0, 3, 1, 2))


def transition_reference_nchw(x_nchw, params):
    """Pure-JAX reference (dropout disabled), literal op order of the module."""
    gamma, beta, run_mean, run_var, conv_w = params
    eps = 1e-5
    xn = (x_nchw - run_mean[None, :, None, None]) * jax.lax.rsqrt(
        run_var[None, :, None, None] + eps)
    y = jnp.maximum(xn * gamma[None, :, None, None] + beta[None, :, None, None],
                    0.0)
    z = jnp.einsum('nchw,oc->nohw', y, conv_w[:, :, 0, 0])
    N, O, H, W = z.shape
    return z.reshape(N, O, H // 2, 2, W // 2, 2).mean(axis=(3, 5))


if __name__ == "__main__":
    key = jax.random.PRNGKey(0)
    k_x, k_g, k_b, k_m, k_v, k_w, k_d = jax.random.split(key, 7)

    N, Cin, Cout, H, W = 2, 8, 4, 16, 16
    x = jax.random.normal(k_x, (N, Cin, H, W), dtype=jnp.float32)

    # Deterministic synthetic parameters (BN affine + running stats, 1x1 conv).
    gamma = 1.0 + 0.1 * jax.random.normal(k_g, (Cin,), dtype=jnp.float32)
    beta = 0.1 * jax.random.normal(k_b, (Cin,), dtype=jnp.float32)
    run_mean = 0.2 * jax.random.normal(k_m, (Cin,), dtype=jnp.float32)
    run_var = jnp.abs(jax.random.normal(k_v, (Cin,), dtype=jnp.float32)) + 0.5
    conv_w = jax.random.normal(k_w, (Cout, Cin, 1, 1), dtype=jnp.float32) * 0.1
    params = (gamma, beta, run_mean, run_var, conv_w)

    # No-dropout path vs pure-JAX reference (bf16 MXU operands -> loose tol).
    out = jax.block_until_ready(transition_forward_nchw(x, params, dropout=0.0))
    ref = jax.block_until_ready(transition_reference_nchw(x, params))
    assert out.shape == (N, Cout, H // 2, W // 2), out.shape
    max_err = float(jnp.max(jnp.abs(out - ref)))
    assert jnp.allclose(out, ref, atol=1e-2, rtol=1e-2), max_err

    # Dropout path (p > 0): shape, finiteness, ~p fraction of exact zeros.
    out_drop = jax.block_until_ready(
        transition_forward_nchw(x, params, dropout=0.5, rng=k_d))
    assert out_drop.shape == (N, Cout, H // 2, W // 2)
    assert bool(jnp.all(jnp.isfinite(out_drop)))
    zero_frac = float(jnp.mean((out_drop == 0.0).astype(jnp.float32)))
    assert 0.25 <= zero_frac <= 0.75, zero_frac

    print("KERNEL_OK")
</pallas_src>

<mosaic_0001>
module attributes {stable_mosaic.version = 11 : i64} {
  func.func @_transition_kernel(%arg0: i32, %arg1: i32, %arg2: memref<1x8x2x8x2x8xf32, #tpu.memory_space<vmem>>, %arg3: memref<1x8xf32, #tpu.memory_space<vmem>>, %arg4: memref<1x8xf32, #tpu.memory_space<vmem>>, %arg5: memref<8x4xbf16, #tpu.memory_space<vmem>>, %arg6: memref<1x64x4xf32, #tpu.memory_space<vmem>>) attributes {dimension_semantics = [#tpu.dimension_semantics<parallel>, #tpu.dimension_semantics<parallel>], iteration_bounds = array<i64: 2, 1>, scalar_prefetch = 0 : i64, scratch_operands = 0 : i64, tpu.core_type = #tpu.core_type<tc>, window_params = [{transform_indices = @transform_0, window_bounds = array<i64: 1, 8, 2, 8, 2, 8>}, {pipeline_mode = #tpu.pipeline_mode<synchronous>, transform_indices = @transform_1, window_bounds = array<i64: 1, 8>}, {pipeline_mode = #tpu.pipeline_mode<synchronous>, transform_indices = @transform_2, window_bounds = array<i64: 1, 8>}, {pipeline_mode = #tpu.pipeline_mode<synchronous>, transform_indices = @transform_3, window_bounds = array<i64: 8, 4>}, {transform_indices = @transform_4, window_bounds = array<i64: 1, 64, 4>}]} {
    %c0 = arith.constant 0 : index
    %c0_0 = arith.constant 0 : index
    %0 = vector.load %arg3[%c0, %c0_0] : memref<1x8xf32, #tpu.memory_space<vmem>>, vector<1x8xf32>
    %1 = vector.shape_cast %0 : vector<1x8xf32> to vector<8xf32>
    %c0_1 = arith.constant 0 : index
    %c0_2 = arith.constant 0 : index
    %2 = vector.load %arg4[%c0_1, %c0_2] : memref<1x8xf32, #tpu.memory_space<vmem>>, vector<1x8xf32>
    %3 = vector.shape_cast %2 : vector<1x8xf32> to vector<8xf32>
    %c0_3 = arith.constant 0 : index
    %c0_4 = arith.constant 0 : index
    %c0_5 = arith.constant 0 : index
    %c0_6 = arith.constant 0 : index
    %c0_7 = arith.constant 0 : index
    %c0_8 = arith.constant 0 : index
    %4 = vector.load %arg2[%c0_3, %c0_4, %c0_5, %c0_6, %c0_7, %c0_8] : memref<1x8x2x8x2x8xf32, #tpu.memory_space<vmem>>, vector<1x8x1x8x1x8xf32>
    %5 = vector.shape_cast %4 : vector<1x8x1x8x1x8xf32> to vector<8x8x8xf32>
    %6 = vector.shape_cast %1 : vector<8xf32> to vector<1x1x8xf32>
    %7 = vector.broadcast %6 : vector<1x1x8xf32> to vector<8x8x8xf32>
    %8 = arith.mulf %5, %7 : vector<8x8x8xf32>
    %9 = vector.shape_cast %3 : vector<8xf32> to vector<1x1x8xf32>
    %10 = vector.broadcast %9 : vector<1x1x8xf32> to vector<8x8x8xf32>
    %11 = arith.addf %8, %10 : vector<8x8x8xf32>
    %cst = arith.constant 0.000000e+00 : f32
    %12 = vector.broadcast %cst : f32 to vector<8x8x8xf32>
    %13 = arith.maximumf %11, %12 : vector<8x8x8xf32>
    %c0_9 = arith.constant 0 : index
    %c0_10 = arith.constant 0 : index
    %c0_11 = arith.constant 0 : index
    %c0_12 = arith.constant 0 : index
    %c1 = arith.constant 1 : index
    %c0_13 = arith.constant 0 : index
    %14 = vector.load %arg2[%c0_9, %c0_10, %c0_11, %c0_12, %c1, %c0_13] : memref<1x8x2x8x2x8xf32, #tpu.memory_space<vmem>>, vector<1x8x1x8x1x8xf32>
    %15 = vector.shape_cast %14 : vector<1x8x1x8x1x8xf32> to vector<8x8x8xf32>
    %16 = vector.shape_cast %1 : vector<8xf32> to vector<1x1x8xf32>
    %17 = vector.broadcast %16 : vector<1x1x8xf32> to vector<8x8x8xf32>
    %18 = arith.mulf %15, %17 : vector<8x8x8xf32>
    %19 = vector.shape_cast %3 : vector<8xf32> to vector<1x1x8xf32>
    %20 = vector.broadcast %19 : vector<1x1x8xf32> to vector<8x8x8xf32>
    %21 = arith.addf %18, %20 : vector<8x8x8xf32>
    %cst_14 = arith.constant 0.000000e+00 : f32
    %22 = vector.broadcast %cst_14 : f32 to vector<8x8x8xf32>
    %23 = arith.maximumf %21, %22 : vector<8x8x8xf32>
    %24 = arith.addf %13, %23 : vector<8x8x8xf32>
    %c0_15 = arith.constant 0 : index
    %c0_16 = arith.constant 0 : index
    %c1_17 = arith.constant 1 : index
    %c0_18 = arith.constant 0 : index
    %c0_19 = arith.constant 0 : index
    %c0_20 = arith.constant 0 : index
    %25 = vector.load %arg2[%c0_15, %c0_16, %c1_17, %c0_18, %c0_19, %c0_20] : memref<1x8x2x8x2x8xf32, #tpu.memory_space<vmem>>, vector<1x8x1x8x1x8xf32>
    %26 = vector.shape_cast %25 : vector<1x8x1x8x1x8xf32> to vector<8x8x8xf32>
    %27 = vector.shape_cast %1 : vector<8xf32> to vector<1x1x8xf32>
    %28 = vector.broadcast %27 : vector<1x1x8xf32> to vector<8x8x8xf32>
    %29 = arith.mulf %26, %28 : vector<8x8x8xf32>
    %30 = vector.shape_cast %3 : vector<8xf32> to vector<1x1x8xf32>
    %31 = vector.broadcast %30 : vector<1x1x8xf32> to vector<8x8x8xf32>
    %32 = arith.addf %29, %31 : vector<8x8x8xf32>
    %cst_21 = arith.constant 0.000000e+00 : f32
    %33 = vector.broadcast %cst_21 : f32 to vector<8x8x8xf32>
    %34 = arith.maximumf %32, %33 : vector<8x8x8xf32>
    %35 = arith.addf %24, %34 : vector<8x8x8xf32>
    %c0_22 = arith.constant 0 : index
    %c0_23 = arith.constant 0 : index
    %c1_24 = arith.constant 1 : index
    %c0_25 = arith.constant 0 : index
    %c1_26 = arith.constant 1 : index
    %c0_27 = arith.constant 0 : index
    %36 = vector.load %arg2[%c0_22, %c0_23, %c1_24, %c0_25, %c1_26, %c0_27] : memref<1x8x2x8x2x8xf32, #tpu.memory_space<vmem>>, vector<1x8x1x8x1x8xf32>
    %37 = vector.shape_cast %36 : vector<1x8x1x8x1x8xf32> to vector<8x8x8xf32>
    %38 = vector.shape_cast %1 : vector<8xf32> to vector<1x1x8xf32>
    %39 = vector.broadcast %38 : vector<1x1x8xf32> to vector<8x8x8xf32>
    %40 = arith.mulf %37, %39 : vector<8x8x8xf32>
    %41 = vector.shape_cast %3 : vector<8xf32> to vector<1x1x8xf32>
    %42 = vector.broadcast %41 : vector<1x1x8xf32> to vector<8x8x8xf32>
    %43 = arith.addf %40, %42 : vector<8x8x8xf32>
    %cst_28 = arith.constant 0.000000e+00 : f32
    %44 = vector.broadcast %cst_28 : f32 to vector<8x8x8xf32>
    %45 = arith.maximumf %43, %44 : vector<8x8x8xf32>
    %46 = arith.addf %35, %45 : vector<8x8x8xf32>
    %47 = vector.shape_cast %46 : vector<8x8x8xf32> to vector<64x8xf32>
    %48 = arith.truncf %47 : vector<64x8xf32> to vector<64x8xbf16>
    %c0_29 = arith.constant 0 : index
    %c0_30 = arith.constant 0 : index
    %49 = vector.load %arg5[%c0_29, %c0_30] : memref<8x4xbf16, #tpu.memory_space<vmem>>, vector<8x4xbf16>
    %cst_31 = arith.constant dense<0.000000e+00> : vector<64x4xf32>
    %50 = tpu.matmul %48, %49, %cst_31 {dimension_numbers = #tpu.dot_dimension_numbers<[1], [0], [0], [1], [0, 0, 1, 1], [], []>} : vector<64x8xbf16>, vector<8x4xbf16>, vector<64x4xf32> -> vector<64x4xf32>
    %c0_32 = arith.constant 0 : index
    %c0_33 = arith.constant 0 : index
    %c0_34 = arith.constant 0 : index
    %51 = vector.load %arg6[%c0_32, %c0_33, %c0_34] : memref<1x64x4xf32, #tpu.memory_space<vmem>>, vector<1x64x4xf32>
    %52 = vector.shape_cast %51 : vector<1x64x4xf32> to vector<64x4xf32>
    %53 = vector.shape_cast %50 : vector<64x4xf32> to vector<1x64x4xf32>
    tpu.vector_store %arg6[%c0_32, %c0_33, %c0_34], %53 {strides = array<i32>} : memref<1x64x4xf32, #tpu.memory_space<vmem>>, vector<1x64x4xf32>,
    return
  }
  func.func @transform_0(%arg0: i32, %arg1: i32) -> (i32, i32, i32, i32, i32, i32) {
    %c0_i32 = arith.constant 0 : i32
    %c0_i32_0 = arith.constant 0 : i32
    %c0_i32_1 = arith.constant 0 : i32
    %c0_i32_2 = arith.constant 0 : i32
    %c0_i32_3 = arith.constant 0 : i32
    return %arg0, %arg1, %c0_i32, %c0_i32_0, %c0_i32_1, %c0_i32_2 : i32, i32, i32, i32, i32, i32
  }
  func.func @transform_1(%arg0: i32, %arg1: i32) -> (i32, i32) {
    %c0_i32 = arith.constant 0 : i32
    %c0_i32_0 = arith.constant 0 : i32
    %c0_i32_1 = arith.constant 0 : i32
    return %c0_i32, %c0_i32_0 : i32, i32
  }
  func.func @transform_2(%arg0: i32, %arg1: i32) -> (i32, i32) {
    %c0_i32 = arith.constant 0 : i32
    %c0_i32_0 = arith.constant 0 : i32
    %c0_i32_1 = arith.constant 0 : i32
    return %c0_i32, %c0_i32_0 : i32, i32
  }
  func.func @transform_3(%arg0: i32, %arg1: i32) -> (i32, i32) {
    %c0_i32 = arith.constant 0 : i32
    %c0_i32_0 = arith.constant 0 : i32
    %c0_i32_1 = arith.constant 0 : i32
    return %c0_i32, %c0_i32_0 : i32, i32
  }
  func.func @transform_4(%arg0: i32, %arg1: i32) -> (i32, i32, i32) {
    %c0_i32 = arith.constant 0 : i32
    %c0_i32_0 = arith.constant 0 : i32
    return %arg0, %arg1, %c0_i32 : i32, i32, i32
  }
}

</mosaic_0001>

<llo_original>
// kernel: tpu_custom_call.1
$region0: #{tpu_custom_call.1}
  #allocation0 [shape = 'u32[]', space=smem, size = 0x4, offset = 0x4, fixed_abs, tag = 'smem constant byte address 0x4 - core index']
  #allocation1 [shape = 'u32[72,128]{1,0:T(1,128)}', space=vmem, size = 0x9000, scoped, tag = 'internal scratch']
  %s0 = inlined_call_operand.hbm [shape: f32[2,8,2,8,2,8], index: 0, kind: input, shape index: {}]
  %s1 = inlined_call_operand.vmem [shape: f32[1,8], index: 1, kind: input, shape index: {}]
  %s2 = inlined_call_operand.vmem [shape: f32[1,8], index: 2, kind: input, shape index: {}]
  %s3 = inlined_call_operand.vmem [shape: bf16[8,4], index: 3, kind: input, shape index: {}]
  %s4 = inlined_call_operand.vmem [shape: f32[2,64,4], index: 4, kind: output, shape index: {}]
  %s5 = sld [smem:[#allocation0]]
  $region53: #{tpu_custom_call.1} parent=0
    _
  %s7 = ssub.s32 1, %s5
  %s8 = scalar_select 0, %s7, %s5
  $region1: #{tpu_custom_call.1} parent=0
    #allocation2 [shape = 'u8[262144]{0}', space=vmem, size = 0x40000, scoped, tag = 'input window, operand 0']
    #allocation3 [shape = 's32[2]{0}', space=sflag, size = 0x8, scoped, tag = 'scoped memory for tpu_custom_call.1']
    %9 = vsyncpa [#allocation3], 0
    %s10 = scalar_lea.sflag [#allocation3], 1
    %11 = vsyncpa %s10, 0
    loop: start=0, step=1, limit=4
    $region2: #{tpu_custom_call.1} parent=1 // loop_pre_header
      _
    $region3: #{tpu_custom_call.1} parent=1 // loop_header
      %s13 = sphi 0, %s17
      %p14 = scmp.ge.s32.totalorder %s13, 4
      %s20 = sphi 0, %s32
      %s21 = sphi 0, %s28
      %s22 = sphi 0, %s20
      %s23 = sphi 0, %s21
      %s24 = sphi 0, %s22
      %s25 = sphi 0, %s23
      %s37 = sphi 0, %s39
      %s40 = sphi 0, %s37
      %s41 = sphi 0, %s40
      %s57 = sphi 0, %s41
      %s61 = sphi 0, %s61
      %s63 = sphi 0, %s61
      %s64 = sphi 0, %s63
      %s78 = sphi 0, %s64
      %s82 = sphi 0, %s82
      %s84 = sphi 0, %s82
      %s85 = sphi 0, %s84
      %s99 = sphi 0, %s85
      %s103 = sphi 0, %s103
      %s105 = sphi 0, %s103
      %s106 = sphi 0, %s105
      %s120 = sphi 0, %s106
      %s128 = sphi 0, %s130
      %s131 = sphi 0, %s128
      %s132 = sphi 0, %s131
      %s148 = sphi 0, %s132
    $region4: #{tpu_custom_call.1} parent=1 // loop_header_branch
      %16 = sbr.rel (%p14) target = $region8
    $region5: #{tpu_custom_call.1} parent=1 // loop_body
      %s18 = ssub.s32 %s13, 1
      %s19 = ssub.s32 %s13, 2
      %s26 = sadd.s32 1, %s21
      %p27 = scmp.ge.s32.totalorder %s26, 1
      %s28 = scalar_select %p27, 0, %s26
      %s29 = sadd.s32 1, %s20
      %s30 = scalar_select %p27, %s29, %s20
      %p31 = scmp.ge.s32.totalorder %s30, 2
      %s32 = scalar_select %p31, 0, %s30
      %s33 = ssub.s32 %s20, %s32
      %s34 = ssub.s32 %s21, %s28
      %s35 = sor.u32 %s33, %s34
      %p36 = scmp.eq.s32.totalorder %s35, 0
      %s38 = sadd.s32 %s37, 1
      %s39 = scalar_select %p36, %s37, %s38
      %p42 = pneg %p36
      %p43 = scmp.eq.s32.totalorder %s13, 1
      %p44 = por %p42, %p43
      %p45 = scmp.ne.s32.totalorder %s37, %s40
      %p46 = scmp.eq.s32.totalorder %s13, 0
      %p47 = por %p45, %p46
      %p48 = scmp.ne.s32.totalorder %s37, %s40
      %p49 = scmp.eq.s32.totalorder %s18, 1
      %p50 = por %p48, %p49
      %p51 = scmp.ne.s32.totalorder %s40, %s41
      %p52 = scmp.eq.s32.totalorder %s18, 0
      %p53 = por %p51, %p52
      %p54 = scmp.ne.s32.totalorder %s40, %s41
      %p55 = scmp.eq.s32.totalorder %s19, 1
      %p56 = por %p54, %p55
      %p58 = scmp.ne.s32.totalorder %s41, %s57
      %p59 = scmp.eq.s32.totalorder %s19, 0
      %p60 = por %p58, %p59
      %s62 = sadd.s32 %s61, 1
      %p65 = scmp.eq.s32.totalorder %s13, 1
      %p66 = scmp.ne.s32.totalorder %s61, %s63
      %p67 = scmp.eq.s32.totalorder %s13, 0
      %p68 = por %p66, %p67
      %p69 = scmp.ne.s32.totalorder %s61, %s63
      %p70 = scmp.eq.s32.totalorder %s18, 1
      %p71 = por %p69, %p70
      %p72 = scmp.ne.s32.totalorder %s63, %s64
      %p73 = scmp.eq.s32.totalorder %s18, 0
      %p74 = por %p72, %p73
      %p75 = scmp.ne.s32.totalorder %s63, %s64
      %p76 = scmp.eq.s32.totalorder %s19, 1
      %p77 = por %p75, %p76
      %p79 = scmp.ne.s32.totalorder %s64, %s78
      %p80 = scmp.eq.s32.totalorder %s19, 0
      %p81 = por %p79, %p80
      %s83 = sadd.s32 %s82, 1
      %p86 = scmp.eq.s32.totalorder %s13, 1
      %p87 = scmp.ne.s32.totalorder %s82, %s84
      %p88 = scmp.eq.s32.totalorder %s13, 0
      %p89 = por %p87, %p88
      %p90 = scmp.ne.s32.totalorder %s82, %s84
      %p91 = scmp.eq.s32.totalorder %s18, 1
      %p92 = por %p90, %p91
      %p93 = scmp.ne.s32.totalorder %s84, %s85
      %p94 = scmp.eq.s32.totalorder %s18, 0
      %p95 = por %p93, %p94
      %p96 = scmp.ne.s32.totalorder %s84, %s85
      %p97 = scmp.eq.s32.totalorder %s19, 1
      %p98 = por %p96, %p97
      %p100 = scmp.ne.s32.totalorder %s85, %s99
      %p101 = scmp.eq.s32.totalorder %s19, 0
      %p102 = por %p100, %p101
      %s104 = sadd.s32 %s103, 1
      %p107 = scmp.eq.s32.totalorder %s13, 1
      %p108 = scmp.ne.s32.totalorder %s103, %s105
      %p109 = scmp.eq.s32.totalorder %s13, 0
      %p110 = por %p108, %p109
      %p111 = scmp.ne.s32.totalorder %s103, %s105
      %p112 = scmp.eq.s32.totalorder %s18, 1
      %p113 = por %p111, %p112
      %p114 = scmp.ne.s32.totalorder %s105, %s106
      %p115 = scmp.eq.s32.totalorder %s18, 0
      %p116 = por %p114, %p115
      %p117 = scmp.ne.s32.totalorder %s105, %s106
      %p118 = scmp.eq.s32.totalorder %s19, 1
      %p119 = por %p117, %p118
      %p121 = scmp.ne.s32.totalorder %s106, %s120
      %p122 = scmp.eq.s32.totalorder %s19, 0
      %p123 = por %p121, %p122
      %s124 = ssub.s32 %s20, %s32
      %s125 = ssub.s32 %s21, %s28
      %s126 = sor.u32 %s124, %s125
      %p127 = scmp.eq.s32.totalorder %s126, 0
      %s129 = sadd.s32 %s128, 1
      %s130 = scalar_select %p127, %s128, %s129
      %p133 = pneg %p127
      %p134 = scmp.eq.s32.totalorder %s13, 1
      %p135 = por %p133, %p134
      %p136 = scmp.ne.s32.totalorder %s128, %s131
      %p137 = scmp.eq.s32.totalorder %s13, 0
      %p138 = por %p136, %p137
      %p139 = scmp.ne.s32.totalorder %s128, %s131
      %p140 = scmp.eq.s32.totalorder %s18, 1
      %p141 = por %p139, %p140
      %p142 = scmp.ne.s32.totalorder %s131, %s132
      %p143 = scmp.eq.s32.totalorder %s18, 0
      %p144 = por %p142, %p143
      %p145 = scmp.ne.s32.totalorder %s131, %s132
      %p146 = scmp.eq.s32.totalorder %s19, 1
      %p147 = por %p145, %p146
      %p149 = scmp.ne.s32.totalorder %s132, %s148
      %p150 = scmp.eq.s32.totalorder %s19, 0
      %p151 = por %p149, %p150
      %p152 = scmp.le.s32.totalorder 1, %s13
      %p153 = scmp.lt.s32.totalorder %s13, 3
      %p154 = pnand %p152, %p153
      %p155 = pneg %p154
      // Predicated region
      $region9: #{tpu_custom_call.1} parent=5 // pred_check
        _
      $region10: #{tpu_custom_call.1} parent=5 // pred_check_branch
        %157 = sbr.rel (%p154) target = $region12
      $region11: #{tpu_custom_call.1} parent=5 // pred_region
        %s158 = ssub.s32 %s13, 1
        // Predicated region
        $region13: #{tpu_custom_call.1} parent=11 // pred_check
          %p159 = pneg %p74
        $region14: #{tpu_custom_call.1} parent=11 // pred_check_branch
          %161 = sbr.rel (%p159) target = $region16
        $region15: #{tpu_custom_call.1} parent=11 // pred_region
          _
        $region16: #{tpu_custom_call.1} parent=11 // pred_fallthru
          _
        // Predicated region
        $region17: #{tpu_custom_call.1} parent=11 // pred_check
          %p162 = pneg %p95
        $region18: #{tpu_custom_call.1} parent=11 // pred_check_branch
          %164 = sbr.rel (%p162) target = $region20
        $region19: #{tpu_custom_call.1} parent=11 // pred_region
          _
        $region20: #{tpu_custom_call.1} parent=11 // pred_fallthru
          _
        // Predicated region
        $region21: #{tpu_custom_call.1} parent=11 // pred_check
          %p165 = pneg %p116
        $region22: #{tpu_custom_call.1} parent=11 // pred_check_branch
          %167 = sbr.rel (%p165) target = $region24
        $region23: #{tpu_custom_call.1} parent=11 // pred_region
          _
        $region24: #{tpu_custom_call.1} parent=11 // pred_fallthru
          _
      $region12: #{tpu_custom_call.1} parent=5 // pred_fallthru
        _
      %p168 = scmp.lt.s32.totalorder %s13, 2
      // Predicated region
      $region25: #{tpu_custom_call.1} parent=5 // pred_check
        %p169 = pneg %p168
      $region26: #{tpu_custom_call.1} parent=5 // pred_check_branch
        %171 = sbr.rel (%p169) target = $region28
      $region27: #{tpu_custom_call.1} parent=5 // pred_region
        // Predicated region
        $region29: #{tpu_custom_call.1} parent=27 // pred_check
          %p172 = pneg %p47
        $region30: #{tpu_custom_call.1} parent=27 // pred_check_branch
          %174 = sbr.rel (%p172) target = $region32
        $region31: #{tpu_custom_call.1} parent=27 // pred_region
          %s175 = sand.u32 %s37, 1
          %s176 = scalar_lea.sflag [#allocation3], %s175
          %s177 = sand.u32 %s37, 1
          %s178 = smul.addr %s177, 256
          %s179 = scalar_lea.vmem [#allocation2], %s178
          %s180 = smul.u32 8, %s21
          %182 = vsyncadd %s176, 0
          %s183 = smul.addr %s180, 16
          %s184 = smul.addr %s20, 128
          %s185 = sadd.s32 %s183, %s184
          %s186 = smul.addr %s185, 2
          %s187 = scalar_lea.hbm %s0, %s186
          %s188 = sshll.u32 %s187, 4
          %s189 = int_to_ptr.hbm [resolvable:$true] %s188
          %s190 = sshll.u32 %s179, 4
          %s191 = int_to_ptr.vmem [resolvable:$true] %s190
          %196 = dma.hbm_to_vmem [thread:$0]  %s189, 4096, %s191, %s176, 32, 32, 2
        $region32: #{tpu_custom_call.1} parent=27 // pred_fallthru
          _
      $region28: #{tpu_custom_call.1} parent=5 // pred_fallthru
        _
      %p197 = scmp.le.s32.totalorder 1, %s13
      %p198 = scmp.lt.s32.totalorder %s13, 3
      %p199 = pnand %p197, %p198
      %p200 = pneg %p199
      // Predicated region
      $region33: #{tpu_custom_call.1} parent=5 // pred_check
        _
      $region34: #{tpu_custom_call.1} parent=5 // pred_check_branch
        %202 = sbr.rel (%p199) target = $region36
      $region35: #{tpu_custom_call.1} parent=5 // pred_region
        %s203 = ssub.s32 %s13, 1
        %s204 = sand.u32 %s40, 1
        %s205 = scalar_lea.sflag [#allocation3], %s204
        %s206 = sand.u32 %s40, 1
        %s207 = smul.addr %s206, 256
        %s208 = scalar_lea.vmem [#allocation2], %s207
        // Predicated region
        $region37: #{tpu_custom_call.1} parent=35 // pred_check
          %p209 = pneg %p53
        $region38: #{tpu_custom_call.1} parent=35 // pred_check_branch
          %211 = sbr.rel (%p209) target = $region40
        $region39: #{tpu_custom_call.1} parent=35 // pred_region
          %213 = dma.done %s205, 4096
        $region40: #{tpu_custom_call.1} parent=35 // pred_fallthru
          _
        %s214 = sand.u32 %s40, 1
        %s215 = scalar_lea.sflag [#allocation3], %s214
        %s216 = sand.u32 %s40, 1
        %s217 = smul.addr %s216, 256
        %s218 = scalar_lea.vmem [#allocation2], %s217
        %p219 = pneg %p53
        %p220 = pneg %p50
        %p221 = pneg %p74
        %p222 = pneg %p71
        %p223 = pneg %p95
        %p224 = pneg %p92
        %p225 = pneg %p116
        %p226 = pneg %p113
        %p227 = pneg %p144
        %p228 = pneg %p141
        %s229 = smul.u32 8, %s23
        %p230 = scmp.lt.s32.totalorder %s22, 1
        %s231 = scalar_select %p230, %s22, 1
        %p232 = scmp.lt.s32.totalorder %s229, 7
        %s233 = scalar_select %p232, %s229, 7
        %s234 = smul.addr %s231, 8
        %s235 = sadd.s32 %s233, %s234
        %s236 = smul.addr %s235, 8
        %s237 = scalar_lea.vmem %s4, %s236
        %s238 = smul.u32 8, %s23
        %s239 = smul.u32 8, %s23
        %p240 = scmp.lt.s32.totalorder %s22, 1
        %s241 = scalar_select %p240, %s22, 1
        %p242 = scmp.lt.s32.totalorder %s239, 7
        %s243 = scalar_select %p242, %s239, 7
        %s244 = smul.addr %s241, 8
        %s245 = sadd.s32 %s243, %s244
        %s246 = smul.addr %s245, 8
        %s247 = scalar_lea.vmem %s4, %s246
        %s248 = smul.u32 8, %s23
        %v250 = vld [vmem:[%s1] sm:$0x1]
        %v251 = vld [vmem:[%s2] sm:$0x1]
        %v252 = vld [vmem:[%s208] sm:$0x1]
        %v253 = vld [vmem:[%s208 + $0x2] sm:$0x1]
        %v254 = vld [vmem:[%s208 + $0x4] sm:$0x1]
        %v255 = vld [vmem:[%s208 + $0x6] sm:$0x1]
        %v256 = vld [vmem:[%s208 + $0x8] sm:$0x1]
        %v257 = vld [vmem:[%s208 + $0xa] sm:$0x1]
        %v258 = vld [vmem:[%s208 + $0xc] sm:$0x1]
        %v259 = vld [vmem:[%s208 + $0xe] sm:$0x1]
        %v260 = vld [vmem:[%s208 + $0x20] sm:$0x1]
        %v261 = vld [vmem:[%s208 + $0x22] sm:$0x1]
        %v262 = vld [vmem:[%s208 + $0x24] sm:$0x1]
        %v263 = vld [vmem:[%s208 + $0x26] sm:$0x1]
        %v264 = vld [vmem:[%s208 + $0x28] sm:$0x1]
        %v265 = vld [vmem:[%s208 + $0x2a] sm:$0x1]
        %v266 = vld [vmem:[%s208 + $0x2c] sm:$0x1]
        %v267 = vld [vmem:[%s208 + $0x2e] sm:$0x1]
        %v268 = vld [vmem:[%s208 + $0x40] sm:$0x1]
        %v269 = vld [vmem:[%s208 + $0x42] sm:$0x1]
        %v270 = vld [vmem:[%s208 + $0x44] sm:$0x1]
        %v271 = vld [vmem:[%s208 + $0x46] sm:$0x1]
        %v272 = vld [vmem:[%s208 + $0x48] sm:$0x1]
        %v273 = vld [vmem:[%s208 + $0x4a] sm:$0x1]
        %v274 = vld [vmem:[%s208 + $0x4c] sm:$0x1]
        %v275 = vld [vmem:[%s208 + $0x4e] sm:$0x1]
        %v276 = vld [vmem:[%s208 + $0x60] sm:$0x1]
        %v277 = vld [vmem:[%s208 + $0x62] sm:$0x1]
        %v278 = vld [vmem:[%s208 + $0x64] sm:$0x1]
        %v279 = vld [vmem:[%s208 + $0x66] sm:$0x1]
        %v280 = vld [vmem:[%s208 + $0x68] sm:$0x1]
        %v281 = vld [vmem:[%s208 + $0x6a] sm:$0x1]
        %v282 = vld [vmem:[%s208 + $0x6c] sm:$0x1]
        %v283 = vld [vmem:[%s208 + $0x6e] sm:$0x1]
        %v284 = vld [vmem:[%s208 + $0x80] sm:$0x1]
        %v285 = vld [vmem:[%s208 + $0x82] sm:$0x1]
        %v286 = vld [vmem:[%s208 + $0x84] sm:$0x1]
        %v287 = vld [vmem:[%s208 + $0x86] sm:$0x1]
        %v288 = vld [vmem:[%s208 + $0x88] sm:$0x1]
        %v289 = vld [vmem:[%s208 + $0x8a] sm:$0x1]
        %v290 = vld [vmem:[%s208 + $0x8c] sm:$0x1]
        %v291 = vld [vmem:[%s208 + $0x8e] sm:$0x1]
        %v292 = vld [vmem:[%s208 + $0xa0] sm:$0x1]
        %v293 = vld [vmem:[%s208 + $0xa2] sm:$0x1]
        %v294 = vld [vmem:[%s208 + $0xa4] sm:$0x1]
        %v295 = vld [vmem:[%s208 + $0xa6] sm:$0x1]
        %v296 = vld [vmem:[%s208 + $0xa8] sm:$0x1]
        %v297 = vld [vmem:[%s208 + $0xaa] sm:$0x1]
        %v298 = vld [vmem:[%s208 + $0xac] sm:$0x1]
        %v299 = vld [vmem:[%s208 + $0xae] sm:$0x1]
        %v300 = vld [vmem:[%s208 + $0xc0] sm:$0x1]
        %v301 = vld [vmem:[%s208 + $0xc2] sm:$0x1]
        %v302 = vld [vmem:[%s208 + $0xc4] sm:$0x1]
        %v303 = vld [vmem:[%s208 + $0xc6] sm:$0x1]
        %v304 = vld [vmem:[%s208 + $0xc8] sm:$0x1]
        %v305 = vld [vmem:[%s208 + $0xca] sm:$0x1]
        %v306 = vld [vmem:[%s208 + $0xcc] sm:$0x1]
        %v307 = vld [vmem:[%s208 + $0xce] sm:$0x1]
        %v308 = vld [vmem:[%s208 + $0xe0] sm:$0x1]
        %v309 = vld [vmem:[%s208 + $0xe2] sm:$0x1]
        %v310 = vld [vmem:[%s208 + $0xe4] sm:$0x1]
        %v311 = vld [vmem:[%s208 + $0xe6] sm:$0x1]
        %v312 = vld [vmem:[%s208 + $0xe8] sm:$0x1]
        %v313 = vld [vmem:[%s208 + $0xea] sm:$0x1]
        %v314 = vld [vmem:[%s208 + $0xec] sm:$0x1]
        %v315 = vld [vmem:[%s208 + $0xee] sm:$0x1]
        %v317 = vperm.slane %v250, 0
        %v319 = vmul.f32 %v252, %v317
        %v320 = vmul.f32 %v253, %v317
        %v321 = vmul.f32 %v254, %v317
        %v322 = vmul.f32 %v255, %v317
        %v323 = vmul.f32 %v256, %v317
        %v324 = vmul.f32 %v257, %v317
        %v325 = vmul.f32 %v258, %v317
        %v326 = vmul.f32 %v259, %v317
        %v327 = vmul.f32 %v260, %v317
        %v328 = vmul.f32 %v261, %v317
        %v329 = vmul.f32 %v262, %v317
        %v330 = vmul.f32 %v263, %v317
        %v331 = vmul.f32 %v264, %v317
        %v332 = vmul.f32 %v265, %v317
        %v333 = vmul.f32 %v266, %v317
        %v334 = vmul.f32 %v267, %v317
        %v335 = vmul.f32 %v268, %v317
        %v336 = vmul.f32 %v269, %v317
        %v337 = vmul.f32 %v270, %v317
        %v338 = vmul.f32 %v271, %v317
        %v339 = vmul.f32 %v272, %v317
        %v340 = vmul.f32 %v273, %v317
        %v341 = vmul.f32 %v274, %v317
        %v342 = vmul.f32 %v275, %v317
        %v343 = vmul.f32 %v276, %v317
        %v344 = vmul.f32 %v277, %v317
        %v345 = vmul.f32 %v278, %v317
        %v346 = vmul.f32 %v279, %v317
        %v347 = vmul.f32 %v280, %v317
        %v348 = vmul.f32 %v281, %v317
        %v349 = vmul.f32 %v282, %v317
        %v350 = vmul.f32 %v283, %v317
        %v351 = vmul.f32 %v284, %v317
        %v352 = vmul.f32 %v285, %v317
        %v353 = vmul.f32 %v286, %v317
        %v354 = vmul.f32 %v287, %v317
        %v355 = vmul.f32 %v288, %v317
        %v356 = vmul.f32 %v289, %v317
        %v357 = vmul.f32 %v290, %v317
        %v358 = vmul.f32 %v291, %v317
        %v359 = vmul.f32 %v292, %v317
        %v360 = vmul.f32 %v293, %v317
        %v361 = vmul.f32 %v294, %v317
        %v362 = vmul.f32 %v295, %v317
        %v363 = vmul.f32 %v296, %v317
        %v364 = vmul.f32 %v297, %v317
        %v365 = vmul.f32 %v298, %v317
        %v366 = vmul.f32 %v299, %v317
        %v367 = vmul.f32 %v300, %v317
        %v368 = vmul.f32 %v301, %v317
        %v369 = vmul.f32 %v302, %v317
        %v370 = vmul.f32 %v303, %v317
        %v371 = vmul.f32 %v304, %v317
        %v372 = vmul.f32 %v305, %v317
        %v373 = vmul.f32 %v306, %v317
        %v374 = vmul.f32 %v307, %v317
        %v375 = vmul.f32 %v308, %v317
        %v376 = vmul.f32 %v309, %v317
        %v377 = vmul.f32 %v310, %v317
        %v378 = vmul.f32 %v311, %v317
        %v379 = vmul.f32 %v312, %v317
        %v380 = vmul.f32 %v313, %v317
        %v381 = vmul.f32 %v314, %v317
        %v382 = vmul.f32 %v315, %v317
        %v384 = vperm.slane %v251, 0
        %v386 = vadd.f32 %v319, %v384
        %v387 = vadd.f32 %v320, %v384
        %v388 = vadd.f32 %v321, %v384
        %v389 = vadd.f32 %v322, %v384
        %v390 = vadd.f32 %v323, %v384
        %v391 = vadd.f32 %v324, %v384
        %v392 = vadd.f32 %v325, %v384
        %v393 = vadd.f32 %v326, %v384
        %v394 = vadd.f32 %v327, %v384
        %v395 = vadd.f32 %v328, %v384
        %v396 = vadd.f32 %v329, %v384
        %v397 = vadd.f32 %v330, %v384
        %v398 = vadd.f32 %v331, %v384
        %v399 = vadd.f32 %v332, %v384
        %v400 = vadd.f32 %v333, %v384
        %v401 = vadd.f32 %v334, %v384
        %v402 = vadd.f32 %v335, %v384
        %v403 = vadd.f32 %v336, %v384
        %v404 = vadd.f32 %v337, %v384
        %v405 = vadd.f32 %v338, %v384
        %v406 = vadd.f32 %v339, %v384
        %v407 = vadd.f32 %v340, %v384
        %v408 = vadd.f32 %v341, %v384
        %v409 = vadd.f32 %v342, %v384
        %v410 = vadd.f32 %v343, %v384
        %v411 = vadd.f32 %v344, %v384
        %v412 = vadd.f32 %v345, %v384
        %v413 = vadd.f32 %v346, %v384
        %v414 = vadd.f32 %v347, %v384
        %v415 = vadd.f32 %v348, %v384
        %v416 = vadd.f32 %v349, %v384
        %v417 = vadd.f32 %v350, %v384
        %v418 = vadd.f32 %v351, %v384
        %v419 = vadd.f32 %v352, %v384
        %v420 = vadd.f32 %v353, %v384
        %v421 = vadd.f32 %v354, %v384
        %v422 = vadd.f32 %v355, %v384
        %v423 = vadd.f32 %v356, %v384
        %v424 = vadd.f32 %v357, %v384
        %v425 = vadd.f32 %v358, %v384
        %v426 = vadd.f32 %v359, %v384
        %v427 = vadd.f32 %v360, %v384
        %v428 = vadd.f32 %v361, %v384
        %v429 = vadd.f32 %v362, %v384
        %v430 = vadd.f32 %v363, %v384
        %v431 = vadd.f32 %v364, %v384
        %v432 = vadd.f32 %v365, %v384
        %v433 = vadd.f32 %v366, %v384
        %v434 = vadd.f32 %v367, %v384
        %v435 = vadd.f32 %v368, %v384
        %v436 = vadd.f32 %v369, %v384
        %v437 = vadd.f32 %v370, %v384
        %v438 = vadd.f32 %v371, %v384
        %v439 = vadd.f32 %v372, %v384
        %v440 = vadd.f32 %v373, %v384
        %v441 = vadd.f32 %v374, %v384
        %v442 = vadd.f32 %v375, %v384
        %v443 = vadd.f32 %v376, %v384
        %v444 = vadd.f32 %v377, %v384
        %v445 = vadd.f32 %v378, %v384
        %v446 = vadd.f32 %v379, %v384
        %v447 = vadd.f32 %v380, %v384
        %v448 = vadd.f32 %v381, %v384
        %v449 = vadd.f32 %v382, %v384
        %v450 = vmax.f32 %v386, 0.0
        %v451 = vmax.f32 %v387, 0.0
        %v452 = vmax.f32 %v388, 0.0
        %v453 = vmax.f32 %v389, 0.0
        %v454 = vmax.f32 %v390, 0.0
        %v455 = vmax.f32 %v391, 0.0
        %v456 = vmax.f32 %v392, 0.0
        %v457 = vmax.f32 %v393, 0.0
        %v458 = vmax.f32 %v394, 0.0
        %v459 = vmax.f32 %v395, 0.0
        %v460 = vmax.f32 %v396, 0.0
        %v461 = vmax.f32 %v397, 0.0
        %v462 = vmax.f32 %v398, 0.0
        %v463 = vmax.f32 %v399, 0.0
        %v464 = vmax.f32 %v400, 0.0
        %v465 = vmax.f32 %v401, 0.0
        %v466 = vmax.f32 %v402, 0.0
        %v467 = vmax.f32 %v403, 0.0
        %v468 = vmax.f32 %v404, 0.0
        %v469 = vmax.f32 %v405, 0.0
        %v470 = vmax.f32 %v406, 0.0
        %v471 = vmax.f32 %v407, 0.0
        %v472 = vmax.f32 %v408, 0.0
        %v473 = vmax.f32 %v409, 0.0
        %v474 = vmax.f32 %v410, 0.0
        %v475 = vmax.f32 %v411, 0.0
        %v476 = vmax.f32 %v412, 0.0
        %v477 = vmax.f32 %v413, 0.0
        %v478 = vmax.f32 %v414, 0.0
        %v479 = vmax.f32 %v415, 0.0
        %v480 = vmax.f32 %v416, 0.0
        %v481 = vmax.f32 %v417, 0.0
        %v482 = vmax.f32 %v418, 0.0
        %v483 = vmax.f32 %v419, 0.0
        %v484 = vmax.f32 %v420, 0.0
        %v485 = vmax.f32 %v421, 0.0
        %v486 = vmax.f32 %v422, 0.0
        %v487 = vmax.f32 %v423, 0.0
        %v488 = vmax.f32 %v424, 0.0
        %v489 = vmax.f32 %v425, 0.0
        %v490 = vmax.f32 %v426, 0.0
        %v491 = vmax.f32 %v427, 0.0
        %v492 = vmax.f32 %v428, 0.0
        %v493 = vmax.f32 %v429, 0.0
        %v494 = vmax.f32 %v430, 0.0
        %v495 = vmax.f32 %v431, 0.0
        %v496 = vmax.f32 %v432, 0.0
        %v497 = vmax.f32 %v433, 0.0
        %v498 = vmax.f32 %v434, 0.0
        %v499 = vmax.f32 %v435, 0.0
        %v500 = vmax.f32 %v436, 0.0
        %v501 = vmax.f32 %v437, 0.0
        %v502 = vmax.f32 %v438, 0.0
        %v503 = vmax.f32 %v439, 0.0
        %v504 = vmax.f32 %v440, 0.0
        %v505 = vmax.f32 %v441, 0.0
        %v506 = vmax.f32 %v442, 0.0
        %v507 = vmax.f32 %v443, 0.0
        %v508 = vmax.f32 %v444, 0.0
        %v509 = vmax.f32 %v445, 0.0
        %v510 = vmax.f32 %v446, 0.0
        %v511 = vmax.f32 %v447, 0.0
        %v512 = vmax.f32 %v448, 0.0
        %v513 = vmax.f32 %v449, 0.0
        %v514 = vld [vmem:[%s208 + $0x1] sm:$0x1]
        %v515 = vld [vmem:[%s208 + $0x3] sm:$0x1]
        %v516 = vld [vmem:[%s208 + $0x5] sm:$0x1]
        %v517 = vld [vmem:[%s208 + $0x7] sm:$0x1]
        %v518 = vld [vmem:[%s208 + $0x9] sm:$0x1]
        %v519 = vld [vmem:[%s208 + $0xb] sm:$0x1]
        %v520 = vld [vmem:[%s208 + $0xd] sm:$0x1]
        %v521 = vld [vmem:[%s208 + $0xf] sm:$0x1]
        %v522 = vld [vmem:[%s208 + $0x21] sm:$0x1]
        %v523 = vld [vmem:[%s208 + $0x23] sm:$0x1]
        %v524 = vld [vmem:[%s208 + $0x25] sm:$0x1]
        %v525 = vld [vmem:[%s208 + $0x27] sm:$0x1]
        %v526 = vld [vmem:[%s208 + $0x29] sm:$0x1]
        %v527 = vld [vmem:[%s208 + $0x2b] sm:$0x1]
        %v528 = vld [vmem:[%s208 + $0x2d] sm:$0x1]
        %v529 = vld [vmem:[%s208 + $0x2f] sm:$0x1]
        %v530 = vld [vmem:[%s208 + $0x41] sm:$0x1]
        %v531 = vld [vmem:[%s208 + $0x43] sm:$0x1]
        %v532 = vld [vmem:[%s208 + $0x45] sm:$0x1]
        %v533 = vld [vmem:[%s208 + $0x47] sm:$0x1]
        %v534 = vld [vmem:[%s208 + $0x49] sm:$0x1]
        %v535 = vld [vmem:[%s208 + $0x4b] sm:$0x1]
        %v536 = vld [vmem:[%s208 + $0x4d] sm:$0x1]
        %v537 = vld [vmem:[%s208 + $0x4f] sm:$0x1]
        %v538 = vld [vmem:[%s208 + $0x61] sm:$0x1]
        %v539 = vld [vmem:[%s208 + $0x63] sm:$0x1]
        %v540 = vld [vmem:[%s208 + $0x65] sm:$0x1]
        %v541 = vld [vmem:[%s208 + $0x67] sm:$0x1]
        %v542 = vld [vmem:[%s208 + $0x69] sm:$0x1]
        %v543 = vld [vmem:[%s208 + $0x6b] sm:$0x1]
        %v544 = vld [vmem:[%s208 + $0x6d] sm:$0x1]
        %v545 = vld [vmem:[%s208 + $0x6f] sm:$0x1]
        %v546 = vld [vmem:[%s208 + $0x81] sm:$0x1]
        %v547 = vld [vmem:[%s208 + $0x83] sm:$0x1]
        %v548 = vld [vmem:[%s208 + $0x85] sm:$0x1]
        %v549 = vld [vmem:[%s208 + $0x87] sm:$0x1]
        %v550 = vld [vmem:[%s208 + $0x89] sm:$0x1]
        %v551 = vld [vmem:[%s208 + $0x8b] sm:$0x1]
        %v552 = vld [vmem:[%s208 + $0x8d] sm:$0x1]
        %v553 = vld [vmem:[%s208 + $0x8f] sm:$0x1]
        %v554 = vld [vmem:[%s208 + $0xa1] sm:$0x1]
        %v555 = vld [vmem:[%s208 + $0xa3] sm:$0x1]
        %v556 = vld [vmem:[%s208 + $0xa5] sm:$0x1]
        %v557 = vld [vmem:[%s208 + $0xa7] sm:$0x1]
        %v558 = vld [vmem:[%s208 + $0xa9] sm:$0x1]
        %v559 = vld [vmem:[%s208 + $0xab] sm:$0x1]
        %v560 = vld [vmem:[%s208 + $0xad] sm:$0x1]
        %v561 = vld [vmem:[%s208 + $0xaf] sm:$0x1]
        %v562 = vld [vmem:[%s208 + $0xc1] sm:$0x1]
        %v563 = vld [vmem:[%s208 + $0xc3] sm:$0x1]
        %v564 = vld [vmem:[%s208 + $0xc5] sm:$0x1]
        %v565 = vld [vmem:[%s208 + $0xc7] sm:$0x1]
        %v566 = vld [vmem:[%s208 + $0xc9] sm:$0x1]
        %v567 = vld [vmem:[%s208 + $0xcb] sm:$0x1]
        %v568 = vld [vmem:[%s208 + $0xcd] sm:$0x1]
        %v569 = vld [vmem:[%s208 + $0xcf] sm:$0x1]
        %v570 = vld [vmem:[%s208 + $0xe1] sm:$0x1]
        %v571 = vld [vmem:[%s208 + $0xe3] sm:$0x1]
        %v572 = vld [vmem:[%s208 + $0xe5] sm:$0x1]
        %v573 = vld [vmem:[%s208 + $0xe7] sm:$0x1]
        %v574 = vld [vmem:[%s208 + $0xe9] sm:$0x1]
        %v575 = vld [vmem:[%s208 + $0xeb] sm:$0x1]
        %v576 = vld [vmem:[%s208 + $0xed] sm:$0x1]
        %v577 = vld [vmem:[%s208 + $0xef] sm:$0x1]
        %v578 = vmul.f32 %v514, %v317
        %v579 = vmul.f32 %v515, %v317
        %v580 = vmul.f32 %v516, %v317
        %v581 = vmul.f32 %v517, %v317
        %v582 = vmul.f32 %v518, %v317
        %v583 = vmul.f32 %v519, %v317
        %v584 = vmul.f32 %v520, %v317
        %v585 = vmul.f32 %v521, %v317
        %v586 = vmul.f32 %v522, %v317
        %v587 = vmul.f32 %v523, %v317
        %v588 = vmul.f32 %v524, %v317
        %v589 = vmul.f32 %v525, %v317
        %v590 = vmul.f32 %v526, %v317
        %v591 = vmul.f32 %v527, %v317
        %v592 = vmul.f32 %v528, %v317
        %v593 = vmul.f32 %v529, %v317
        %v594 = vmul.f32 %v530, %v317
        %v595 = vmul.f32 %v531, %v317
        %v596 = vmul.f32 %v532, %v317
        %v597 = vmul.f32 %v533, %v317
        %v598 = vmul.f32 %v534, %v317
        %v599 = vmul.f32 %v535, %v317
        %v600 = vmul.f32 %v536, %v317
        %v601 = vmul.f32 %v537, %v317
        %v602 = vmul.f32 %v538, %v317
        %v603 = vmul.f32 %v539, %v317
        %v604 = vmul.f32 %v540, %v317
        %v605 = vmul.f32 %v541, %v317
        %v606 = vmul.f32 %v542, %v317
        %v607 = vmul.f32 %v543, %v317
        %v608 = vmul.f32 %v544, %v317
        %v609 = vmul.f32 %v545, %v317
        %v610 = vmul.f32 %v546, %v317
        %v611 = vmul.f32 %v547, %v317
        %v612 = vmul.f32 %v548, %v317
        %v613 = vmul.f32 %v549, %v317
        %v614 = vmul.f32 %v550, %v317
        %v615 = vmul.f32 %v551, %v317
        %v616 = vmul.f32 %v552, %v317
        %v617 = vmul.f32 %v553, %v317
        %v618 = vmul.f32 %v554, %v317
        %v619 = vmul.f32 %v555, %v317
        %v620 = vmul.f32 %v556, %v317
        %v621 = vmul.f32 %v557, %v317
        %v622 = vmul.f32 %v558, %v317
        %v623 = vmul.f32 %v559, %v317
        %v624 = vmul.f32 %v560, %v317
        %v625 = vmul.f32 %v561, %v317
        %v626 = vmul.f32 %v562, %v317
        %v627 = vmul.f32 %v563, %v317
        %v628 = vmul.f32 %v564, %v317
        %v629 = vmul.f32 %v565, %v317
        %v630 = vmul.f32 %v566, %v317
        %v631 = vmul.f32 %v567, %v317
        %v632 = vmul.f32 %v568, %v317
        %v633 = vmul.f32 %v569, %v317
        %v634 = vmul.f32 %v570, %v317
        %v635 = vmul.f32 %v571, %v317
        %v636 = vmul.f32 %v572, %v317
        %v637 = vmul.f32 %v573, %v317
        %v638 = vmul.f32 %v574, %v317
        %v639 = vmul.f32 %v575, %v317
        %v640 = vmul.f32 %v576, %v317
        %v641 = vmul.f32 %v577, %v317
        %v642 = vadd.f32 %v578, %v384
        %v643 = vadd.f32 %v579, %v384
        %v644 = vadd.f32 %v580, %v384
        %v645 = vadd.f32 %v581, %v384
        %v646 = vadd.f32 %v582, %v384
        %v647 = vadd.f32 %v583, %v384
        %v648 = vadd.f32 %v584, %v384
        %v649 = vadd.f32 %v585, %v384
        %v650 = vadd.f32 %v586, %v384
        %v651 = vadd.f32 %v587, %v384
        %v652 = vadd.f32 %v588, %v384
        %v653 = vadd.f32 %v589, %v384
        %v654 = vadd.f32 %v590, %v384
        %v655 = vadd.f32 %v591, %v384
        %v656 = vadd.f32 %v592, %v384
        %v657 = vadd.f32 %v593, %v384
        %v658 = vadd.f32 %v594, %v384
        %v659 = vadd.f32 %v595, %v384
        %v660 = vadd.f32 %v596, %v384
        %v661 = vadd.f32 %v597, %v384
        %v662 = vadd.f32 %v598, %v384
        %v663 = vadd.f32 %v599, %v384
        %v664 = vadd.f32 %v600, %v384
        %v665 = vadd.f32 %v601, %v384
        %v666 = vadd.f32 %v602, %v384
        %v667 = vadd.f32 %v603, %v384
        %v668 = vadd.f32 %v604, %v384
        %v669 = vadd.f32 %v605, %v384
        %v670 = vadd.f32 %v606, %v384
        %v671 = vadd.f32 %v607, %v384
        %v672 = vadd.f32 %v608, %v384
        %v673 = vadd.f32 %v609, %v384
        %v674 = vadd.f32 %v610, %v384
        %v675 = vadd.f32 %v611, %v384
        %v676 = vadd.f32 %v612, %v384
        %v677 = vadd.f32 %v613, %v384
        %v678 = vadd.f32 %v614, %v384
        %v679 = vadd.f32 %v615, %v384
        %v680 = vadd.f32 %v616, %v384
        %v681 = vadd.f32 %v617, %v384
        %v682 = vadd.f32 %v618, %v384
        %v683 = vadd.f32 %v619, %v384
        %v684 = vadd.f32 %v620, %v384
        %v685 = vadd.f32 %v621, %v384
        %v686 = vadd.f32 %v622, %v384
        %v687 = vadd.f32 %v623, %v384
        %v688 = vadd.f32 %v624, %v384
        %v689 = vadd.f32 %v625, %v384
        %v690 = vadd.f32 %v626, %v384
        %v691 = vadd.f32 %v627, %v384
        %v692 = vadd.f32 %v628, %v384
        %v693 = vadd.f32 %v629, %v384
        %v694 = vadd.f32 %v630, %v384
        %v695 = vadd.f32 %v631, %v384
        %v696 = vadd.f32 %v632, %v384
        %v697 = vadd.f32 %v633, %v384
        %v698 = vadd.f32 %v634, %v384
        %v699 = vadd.f32 %v635, %v384
        %v700 = vadd.f32 %v636, %v384
        %v701 = vadd.f32 %v637, %v384
        %v702 = vadd.f32 %v638, %v384
        %v703 = vadd.f32 %v639, %v384
        %v704 = vadd.f32 %v640, %v384
        %v705 = vadd.f32 %v641, %v384
        %v706 = vmax.f32 %v642, 0.0
        %v707 = vmax.f32 %v643, 0.0
        %v708 = vmax.f32 %v644, 0.0
        %v709 = vmax.f32 %v645, 0.0
        %v710 = vmax.f32 %v646, 0.0
        %v711 = vmax.f32 %v647, 0.0
        %v712 = vmax.f32 %v648, 0.0
        %v713 = vmax.f32 %v649, 0.0
        %v714 = vmax.f32 %v650, 0.0
        %v715 = vmax.f32 %v651, 0.0
        %v716 = vmax.f32 %v652, 0.0
        %v717 = vmax.f32 %v653, 0.0
        %v718 = vmax.f32 %v654, 0.0
        %v719 = vmax.f32 %v655, 0.0
        %v720 = vmax.f32 %v656, 0.0
        %v721 = vmax.f32 %v657, 0.0
        %v722 = vmax.f32 %v658, 0.0
        %v723 = vmax.f32 %v659, 0.0
        %v724 = vmax.f32 %v660, 0.0
        %v725 = vmax.f32 %v661, 0.0
        %v726 = vmax.f32 %v662, 0.0
        %v727 = vmax.f32 %v663, 0.0
        %v728 = vmax.f32 %v664, 0.0
        %v729 = vmax.f32 %v665, 0.0
        %v730 = vmax.f32 %v666, 0.0
        %v731 = vmax.f32 %v667, 0.0
        %v732 = vmax.f32 %v668, 0.0
        %v733 = vmax.f32 %v669, 0.0
        %v734 = vmax.f32 %v670, 0.0
        %v735 = vmax.f32 %v671, 0.0
        %v736 = vmax.f32 %v672, 0.0
        %v737 = vmax.f32 %v673, 0.0
        %v738 = vmax.f32 %v674, 0.0
        %v739 = vmax.f32 %v675, 0.0
        %v740 = vmax.f32 %v676, 0.0
        %v741 = vmax.f32 %v677, 0.0
        %v742 = vmax.f32 %v678, 0.0
        %v743 = vmax.f32 %v679, 0.0
        %v744 = vmax.f32 %v680, 0.0
        %v745 = vmax.f32 %v681, 0.0
        %v746 = vmax.f32 %v682, 0.0
        %v747 = vmax.f32 %v683, 0.0
        %v748 = vmax.f32 %v684, 0.0
        %v749 = vmax.f32 %v685, 0.0
        %v750 = vmax.f32 %v686, 0.0
        %v751 = vmax.f32 %v687, 0.0
        %v752 = vmax.f32 %v688, 0.0
        %v753 = vmax.f32 %v689, 0.0
        %v754 = vmax.f32 %v690, 0.0
        %v755 = vmax.f32 %v691, 0.0
        %v756 = vmax.f32 %v692, 0.0
        %v757 = vmax.f32 %v693, 0.0
        %v758 = vmax.f32 %v694, 0.0
        %v759 = vmax.f32 %v695, 0.0
        %v760 = vmax.f32 %v696, 0.0
        %v761 = vmax.f32 %v697, 0.0
        %v762 = vmax.f32 %v698, 0.0
        %v763 = vmax.f32 %v699, 0.0
        %v764 = vmax.f32 %v700, 0.0
        %v765 = vmax.f32 %v701, 0.0
        %v766 = vmax.f32 %v702, 0.0
        %v767 = vmax.f32 %v703, 0.0
        %v768 = vmax.f32 %v704, 0.0
        %v769 = vmax.f32 %v705, 0.0
        %v770 = vadd.f32 %v450, %v706
        %v771 = vadd.f32 %v451, %v707
        %v772 = vadd.f32 %v452, %v708
        %v773 = vadd.f32 %v453, %v709
        %v774 = vadd.f32 %v454, %v710
        %v775 = vadd.f32 %v455, %v711
        %v776 = vadd.f32 %v456, %v712
        %v777 = vadd.f32 %v457, %v713
        %v778 = vadd.f32 %v458, %v714
        %v779 = vadd.f32 %v459, %v715
        %v780 = vadd.f32 %v460, %v716
        %v781 = vadd.f32 %v461, %v717
        %v782 = vadd.f32 %v462, %v718
        %v783 = vadd.f32 %v463, %v719
        %v784 = vadd.f32 %v464, %v720
        %v785 = vadd.f32 %v465, %v721
        %v786 = vadd.f32 %v466, %v722
        %v787 = vadd.f32 %v467, %v723
        %v788 = vadd.f32 %v468, %v724
        %v789 = vadd.f32 %v469, %v725
        %v790 = vadd.f32 %v470, %v726
        %v791 = vadd.f32 %v471, %v727
        %v792 = vadd.f32 %v472, %v728
        %v793 = vadd.f32 %v473, %v729
        %v794 = vadd.f32 %v474, %v730
        %v795 = vadd.f32 %v475, %v731
        %v796 = vadd.f32 %v476, %v732
        %v797 = vadd.f32 %v477, %v733
        %v798 = vadd.f32 %v478, %v734
        %v799 = vadd.f32 %v479, %v735
        %v800 = vadd.f32 %v480, %v736
        %v801 = vadd.f32 %v481, %v737
        %v802 = vadd.f32 %v482, %v738
        %v803 = vadd.f32 %v483, %v739
        %v804 = vadd.f32 %v484, %v740
        %v805 = vadd.f32 %v485, %v741
        %v806 = vadd.f32 %v486, %v742
        %v807 = vadd.f32 %v487, %v743
        %v808 = vadd.f32 %v488, %v744
        %v809 = vadd.f32 %v489, %v745
        %v810 = vadd.f32 %v490, %v746
        %v811 = vadd.f32 %v491, %v747
        %v812 = vadd.f32 %v492, %v748
        %v813 = vadd.f32 %v493, %v749
        %v814 = vadd.f32 %v494, %v750
        %v815 = vadd.f32 %v495, %v751
        %v816 = vadd.f32 %v496, %v752
        %v817 = vadd.f32 %v497, %v753
        %v818 = vadd.f32 %v498, %v754
        %v819 = vadd.f32 %v499, %v755
        %v820 = vadd.f32 %v500, %v756
        %v821 = vadd.f32 %v501, %v757
        %v822 = vadd.f32 %v502, %v758
        %v823 = vadd.f32 %v503, %v759
        %v824 = vadd.f32 %v504, %v760
        %v825 = vadd.f32 %v505, %v761
        %v826 = vadd.f32 %v506, %v762
        %v827 = vadd.f32 %v507, %v763
        %v828 = vadd.f32 %v508, %v764
        %v829 = vadd.f32 %v509, %v765
        %v830 = vadd.f32 %v510, %v766
        %v831 = vadd.f32 %v511, %v767
        %v832 = vadd.f32 %v512, %v768
        %v833 = vadd.f32 %v513, %v769
        %s834 = scalar_lea.vmem %s208, 16 [#allocation2]
        %v835 = vld [vmem:[%s834] sm:$0x1]
        %v836 = vld [vmem:[%s834 + $0x2] sm:$0x1]
        %v837 = vld [vmem:[%s834 + $0x4] sm:$0x1]
        %v838 = vld [vmem:[%s834 + $0x6] sm:$0x1]
        %v839 = vld [vmem:[%s834 + $0x8] sm:$0x1]
        %v840 = vld [vmem:[%s834 + $0xa] sm:$0x1]
        %v841 = vld [vmem:[%s834 + $0xc] sm:$0x1]
        %v842 = vld [vmem:[%s834 + $0xe] sm:$0x1]
        %v843 = vld [vmem:[%s834 + $0x20] sm:$0x1]
        %v844 = vld [vmem:[%s834 + $0x22] sm:$0x1]
        %v845 = vld [vmem:[%s834 + $0x24] sm:$0x1]
        %v846 = vld [vmem:[%s834 + $0x26] sm:$0x1]
        %v847 = vld [vmem:[%s834 + $0x28] sm:$0x1]
        %v848 = vld [vmem:[%s834 + $0x2a] sm:$0x1]
        %v849 = vld [vmem:[%s834 + $0x2c] sm:$0x1]
        %v850 = vld [vmem:[%s834 + $0x2e] sm:$0x1]
        %v851 = vld [vmem:[%s834 + $0x40] sm:$0x1]
        %v852 = vld [vmem:[%s834 + $0x42] sm:$0x1]
        %v853 = vld [vmem:[%s834 + $0x44] sm:$0x1]
        %v854 = vld [vmem:[%s834 + $0x46] sm:$0x1]
        %v855 = vld [vmem:[%s834 + $0x48] sm:$0x1]
        %v856 = vld [vmem:[%s834 + $0x4a] sm:$0x1]
        %v857 = vld [vmem:[%s834 + $0x4c] sm:$0x1]
        %v858 = vld [vmem:[%s834 + $0x4e] sm:$0x1]
        %v859 = vld [vmem:[%s834 + $0x60] sm:$0x1]
        %v860 = vld [vmem:[%s834 + $0x62] sm:$0x1]
        %v861 = vld [vmem:[%s834 + $0x64] sm:$0x1]
        %v862 = vld [vmem:[%s834 + $0x66] sm:$0x1]
        %v863 = vld [vmem:[%s834 + $0x68] sm:$0x1]
        %v864 = vld [vmem:[%s834 + $0x6a] sm:$0x1]
        %v865 = vld [vmem:[%s834 + $0x6c] sm:$0x1]
        %v866 = vld [vmem:[%s834 + $0x6e] sm:$0x1]
        %v867 = vld [vmem:[%s834 + $0x80] sm:$0x1]
        %v868 = vld [vmem:[%s834 + $0x82] sm:$0x1]
        %v869 = vld [vmem:[%s834 + $0x84] sm:$0x1]
        %v870 = vld [vmem:[%s834 + $0x86] sm:$0x1]
        %v871 = vld [vmem:[%s834 + $0x88] sm:$0x1]
        %v872 = vld [vmem:[%s834 + $0x8a] sm:$0x1]
        %v873 = vld [vmem:[%s834 + $0x8c] sm:$0x1]
        %v874 = vld [vmem:[%s834 + $0x8e] sm:$0x1]
        %v875 = vld [vmem:[%s834 + $0xa0] sm:$0x1]
        %v876 = vld [vmem:[%s834 + $0xa2] sm:$0x1]
        %v877 = vld [vmem:[%s834 + $0xa4] sm:$0x1]
        %v878 = vld [vmem:[%s834 + $0xa6] sm:$0x1]
        %v879 = vld [vmem:[%s834 + $0xa8] sm:$0x1]
        %v880 = vld [vmem:[%s834 + $0xaa] sm:$0x1]
        %v881 = vld [vmem:[%s834 + $0xac] sm:$0x1]
        %v882 = vld [vmem:[%s834 + $0xae] sm:$0x1]
        %v883 = vld [vmem:[%s834 + $0xc0] sm:$0x1]
        %v884 = vld [vmem:[%s834 + $0xc2] sm:$0x1]
        %v885 = vld [vmem:[%s834 + $0xc4] sm:$0x1]
        %v886 = vld [vmem:[%s834 + $0xc6] sm:$0x1]
        %v887 = vld [vmem:[%s834 + $0xc8] sm:$0x1]
        %v888 = vld [vmem:[%s834 + $0xca] sm:$0x1]
        %v889 = vld [vmem:[%s834 + $0xcc] sm:$0x1]
        %v890 = vld [vmem:[%s834 + $0xce] sm:$0x1]
        %v891 = vld [vmem:[%s834 + $0xe0] sm:$0x1]
        %v892 = vld [vmem:[%s834 + $0xe2] sm:$0x1]
        %v893 = vld [vmem:[%s834 + $0xe4] sm:$0x1]
        %v894 = vld [vmem:[%s834 + $0xe6] sm:$0x1]
        %v895 = vld [vmem:[%s834 + $0xe8] sm:$0x1]
        %v896 = vld [vmem:[%s834 + $0xea] sm:$0x1]
        %v897 = vld [vmem:[%s834 + $0xec] sm:$0x1]
        %v898 = vld [vmem:[%s834 + $0xee] sm:$0x1]
        %v899 = vmul.f32 %v835, %v317
        %v900 = vmul.f32 %v836, %v317
        %v901 = vmul.f32 %v837, %v317
        %v902 = vmul.f32 %v838, %v317
        %v903 = vmul.f32 %v839, %v317
        %v904 = vmul.f32 %v840, %v317
        %v905 = vmul.f32 %v841, %v317
        %v906 = vmul.f32 %v842, %v317
        %v907 = vmul.f32 %v843, %v317
        %v908 = vmul.f32 %v844, %v317
        %v909 = vmul.f32 %v845, %v317
        %v910 = vmul.f32 %v846, %v317
        %v911 = vmul.f32 %v847, %v317
        %v912 = vmul.f32 %v848, %v317
        %v913 = vmul.f32 %v849, %v317
        %v914 = vmul.f32 %v850, %v317
        %v915 = vmul.f32 %v851, %v317
        %v916 = vmul.f32 %v852, %v317
        %v917 = vmul.f32 %v853, %v317
        %v918 = vmul.f32 %v854, %v317
        %v919 = vmul.f32 %v855, %v317
        %v920 = vmul.f32 %v856, %v317
        %v921 = vmul.f32 %v857, %v317
        %v922 = vmul.f32 %v858, %v317
        %v923 = vmul.f32 %v859, %v317
        %v924 = vmul.f32 %v860, %v317
        %v925 = vmul.f32 %v861, %v317
        %v926 = vmul.f32 %v862, %v317
        %v927 = vmul.f32 %v863, %v317
        %v928 = vmul.f32 %v864, %v317
        %v929 = vmul.f32 %v865, %v317
        %v930 = vmul.f32 %v866, %v317
        %v931 = vmul.f32 %v867, %v317
        %v932 = vmul.f32 %v868, %v317
        %v933 = vmul.f32 %v869, %v317
        %v934 = vmul.f32 %v870, %v317
        %v935 = vmul.f32 %v871, %v317
        %v936 = vmul.f32 %v872, %v317
        %v937 = vmul.f32 %v873, %v317
        %v938 = vmul.f32 %v874, %v317
        %v939 = vmul.f32 %v875, %v317
        %v940 = vmul.f32 %v876, %v317
        %v941 = vmul.f32 %v877, %v317
        %v942 = vmul.f32 %v878, %v317
        %v943 = vmul.f32 %v879, %v317
        %v944 = vmul.f32 %v880, %v317
        %v945 = vmul.f32 %v881, %v317
        %v946 = vmul.f32 %v882, %v317
        %v947 = vmul.f32 %v883, %v317
        %v948 = vmul.f32 %v884, %v317
        %v949 = vmul.f32 %v885, %v317
        %v950 = vmul.f32 %v886, %v317
        %v951 = vmul.f32 %v887, %v317
        %v952 = vmul.f32 %v888, %v317
        %v953 = vmul.f32 %v889, %v317
        %v954 = vmul.f32 %v890, %v317
        %v955 = vmul.f32 %v891, %v317
        %v956 = vmul.f32 %v892, %v317
        %v957 = vmul.f32 %v893, %v317
        %v958 = vmul.f32 %v894, %v317
        %v959 = vmul.f32 %v895, %v317
        %v960 = vmul.f32 %v896, %v317
        %v961 = vmul.f32 %v897, %v317
        %v962 = vmul.f32 %v898, %v317
        %v963 = vadd.f32 %v899, %v384
        %v964 = vadd.f32 %v900, %v384
        %v965 = vadd.f32 %v901, %v384
        %v966 = vadd.f32 %v902, %v384
        %v967 = vadd.f32 %v903, %v384
        %v968 = vadd.f32 %v904, %v384
        %v969 = vadd.f32 %v905, %v384
        %v970 = vadd.f32 %v906, %v384
        %v971 = vadd.f32 %v907, %v384
        %v972 = vadd.f32 %v908, %v384
        %v973 = vadd.f32 %v909, %v384
        %v974 = vadd.f32 %v910, %v384
        %v975 = vadd.f32 %v911, %v384
        %v976 = vadd.f32 %v912, %v384
        %v977 = vadd.f32 %v913, %v384
        %v978 = vadd.f32 %v914, %v384
        %v979 = vadd.f32 %v915, %v384
        %v980 = vadd.f32 %v916, %v384
        %v981 = vadd.f32 %v917, %v384
        %v982 = vadd.f32 %v918, %v384
        %v983 = vadd.f32 %v919, %v384
        %v984 = vadd.f32 %v920, %v384
        %v985 = vadd.f32 %v921, %v384
        %v986 = vadd.f32 %v922, %v384
        %v987 = vadd.f32 %v923, %v384
        %v988 = vadd.f32 %v924, %v384
        %v989 = vadd.f32 %v925, %v384
        %v990 = vadd.f32 %v926, %v384
        %v991 = vadd.f32 %v927, %v384
        %v992 = vadd.f32 %v928, %v384
        %v993 = vadd.f32 %v929, %v384
        %v994 = vadd.f32 %v930, %v384
        %v995 = vadd.f32 %v931, %v384
        %v996 = vadd.f32 %v932, %v384
        %v997 = vadd.f32 %v933, %v384
        %v998 = vadd.f32 %v934, %v384
        %v999 = vadd.f32 %v935, %v384
        %v1000 = vadd.f32 %v936, %v384
        %v1001 = vadd.f32 %v937, %v384
        %v1002 = vadd.f32 %v938, %v384
        %v1003 = vadd.f32 %v939, %v384
        %v1004 = vadd.f32 %v940, %v384
        %v1005 = vadd.f32 %v941, %v384
        %v1006 = vadd.f32 %v942, %v384
        %v1007 = vadd.f32 %v943, %v384
        %v1008 = vadd.f32 %v944, %v384
        %v1009 = vadd.f32 %v945, %v384
        %v1010 = vadd.f32 %v946, %v384
        %v1011 = vadd.f32 %v947, %v384
        %v1012 = vadd.f32 %v948, %v384
        %v1013 = vadd.f32 %v949, %v384
        %v1014 = vadd.f32 %v950, %v384
        %v1015 = vadd.f32 %v951, %v384
        %v1016 = vadd.f32 %v952, %v384
        %v1017 = vadd.f32 %v953, %v384
        %v1018 = vadd.f32 %v954, %v384
        %v1019 = vadd.f32 %v955, %v384
        %v1020 = vadd.f32 %v956, %v384
        %v1021 = vadd.f32 %v957, %v384
        %v1022 = vadd.f32 %v958, %v384
        %v1023 = vadd.f32 %v959, %v384
        %v1024 = vadd.f32 %v960, %v384
        %v1025 = vadd.f32 %v961, %v384
        %v1026 = vadd.f32 %v962, %v384
        %v1027 = vmax.f32 %v963, 0.0
        %v1028 = vmax.f32 %v964, 0.0
        %v1029 = vmax.f32 %v965, 0.0
        %v1030 = vmax.f32 %v966, 0.0
        %v1031 = vmax.f32 %v967, 0.0
        %v1032 = vmax.f32 %v968, 0.0
        %v1033 = vmax.f32 %v969, 0.0
        %v1034 = vmax.f32 %v970, 0.0
        %v1035 = vmax.f32 %v971, 0.0
        %v1036 = vmax.f32 %v972, 0.0
        %v1037 = vmax.f32 %v973, 0.0
        %v1038 = vmax.f32 %v974, 0.0
        %v1039 = vmax.f32 %v975, 0.0
        %v1040 = vmax.f32 %v976, 0.0
        %v1041 = vmax.f32 %v977, 0.0
        %v1042 = vmax.f32 %v978, 0.0
        %v1043 = vmax.f32 %v979, 0.0
        %v1044 = vmax.f32 %v980, 0.0
        %v1045 = vmax.f32 %v981, 0.0
        %v1046 = vmax.f32 %v982, 0.0
        %v1047 = vmax.f32 %v983, 0.0
        %v1048 = vmax.f32 %v984, 0.0
        %v1049 = vmax.f32 %v985, 0.0
        %v1050 = vmax.f32 %v986, 0.0
        %v1051 = vmax.f32 %v987, 0.0
        %v1052 = vmax.f32 %v988, 0.0
        %v1053 = vmax.f32 %v989, 0.0
        %v1054 = vmax.f32 %v990, 0.0
        %v1055 = vmax.f32 %v991, 0.0
        %v1056 = vmax.f32 %v992, 0.0
        %v1057 = vmax.f32 %v993, 0.0
        %v1058 = vmax.f32 %v994, 0.0
        %v1059 = vmax.f32 %v995, 0.0
        %v1060 = vmax.f32 %v996, 0.0
        %v1061 = vmax.f32 %v997, 0.0
        %v1062 = vmax.f32 %v998, 0.0
        %v1063 = vmax.f32 %v999, 0.0
        %v1064 = vmax.f32 %v1000, 0.0
        %v1065 = vmax.f32 %v1001, 0.0
        %v1066 = vmax.f32 %v1002, 0.0
        %v1067 = vmax.f32 %v1003, 0.0
        %v1068 = vmax.f32 %v1004, 0.0
        %v1069 = vmax.f32 %v1005, 0.0
        %v1070 = vmax.f32 %v1006, 0.0
        %v1071 = vmax.f32 %v1007, 0.0
        %v1072 = vmax.f32 %v1008, 0.0
        %v1073 = vmax.f32 %v1009, 0.0
        %v1074 = vmax.f32 %v1010, 0.0
        %v1075 = vmax.f32 %v1011, 0.0
        %v1076 = vmax.f32 %v1012, 0.0
        %v1077 = vmax.f32 %v1013, 0.0
        %v1078 = vmax.f32 %v1014, 0.0
        %v1079 = vmax.f32 %v1015, 0.0
        %v1080 = vmax.f32 %v1016, 0.0
        %v1081 = vmax.f32 %v1017, 0.0
        %v1082 = vmax.f32 %v1018, 0.0
        %v1083 = vmax.f32 %v1019, 0.0
        %v1084 = vmax.f32 %v1020, 0.0
        %v1085 = vmax.f32 %v1021, 0.0
        %v1086 = vmax.f32 %v1022, 0.0
        %v1087 = vmax.f32 %v1023, 0.0
        %v1088 = vmax.f32 %v1024, 0.0
        %v1089 = vmax.f32 %v1025, 0.0
        %v1090 = vmax.f32 %v1026, 0.0
        %v1091 = vadd.f32 %v770, %v1027
        %v1092 = vadd.f32 %v771, %v1028
        %v1093 = vadd.f32 %v772, %v1029
        %v1094 = vadd.f32 %v773, %v1030
        %v1095 = vadd.f32 %v774, %v1031
        %v1096 = vadd.f32 %v775, %v1032
        %v1097 = vadd.f32 %v776, %v1033
        %v1098 = vadd.f32 %v777, %v1034
        %v1099 = vadd.f32 %v778, %v1035
        %v1100 = vadd.f32 %v779, %v1036
        %v1101 = vadd.f32 %v780, %v1037
        %v1102 = vadd.f32 %v781, %v1038
        %v1103 = vadd.f32 %v782, %v1039
        %v1104 = vadd.f32 %v783, %v1040
        %v1105 = vadd.f32 %v784, %v1041
        %v1106 = vadd.f32 %v785, %v1042
        %v1107 = vadd.f32 %v786, %v1043
        %v1108 = vadd.f32 %v787, %v1044
        %v1109 = vadd.f32 %v788, %v1045
        %v1110 = vadd.f32 %v789, %v1046
        %v1111 = vadd.f32 %v790, %v1047
        %v1112 = vadd.f32 %v791, %v1048
        %v1113 = vadd.f32 %v792, %v1049
        %v1114 = vadd.f32 %v793, %v1050
        %v1115 = vadd.f32 %v794, %v1051
        %v1116 = vadd.f32 %v795, %v1052
        %v1117 = vadd.f32 %v796, %v1053
        %v1118 = vadd.f32 %v797, %v1054
        %v1119 = vadd.f32 %v798, %v1055
        %v1120 = vadd.f32 %v799, %v1056
        %v1121 = vadd.f32 %v800, %v1057
        %v1122 = vadd.f32 %v801, %v1058
        %v1123 = vadd.f32 %v802, %v1059
        %v1124 = vadd.f32 %v803, %v1060
        %v1125 = vadd.f32 %v804, %v1061
        %v1126 = vadd.f32 %v805, %v1062
        %v1127 = vadd.f32 %v806, %v1063
        %v1128 = vadd.f32 %v807, %v1064
        %v1129 = vadd.f32 %v808, %v1065
        %v1130 = vadd.f32 %v809, %v1066
        %v1131 = vadd.f32 %v810, %v1067
        %v1132 = vadd.f32 %v811, %v1068
        %v1133 = vadd.f32 %v812, %v1069
        %v1134 = vadd.f32 %v813, %v1070
        %v1135 = vadd.f32 %v814, %v1071
        %v1136 = vadd.f32 %v815, %v1072
        %v1137 = vadd.f32 %v816, %v1073
        %v1138 = vadd.f32 %v817, %v1074
        %v1139 = vadd.f32 %v818, %v1075
        %v1140 = vadd.f32 %v819, %v1076
        %v1141 = vadd.f32 %v820, %v1077
        %v1142 = vadd.f32 %v821, %v1078
        %v1143 = vadd.f32 %v822, %v1079
        %v1144 = vadd.f32 %v823, %v1080
        %v1145 = vadd.f32 %v824, %v1081
        %v1146 = vadd.f32 %v825, %v1082
        %v1147 = vadd.f32 %v826, %v1083
        %v1148 = vadd.f32 %v827, %v1084
        %v1149 = vadd.f32 %v828, %v1085
        %v1150 = vadd.f32 %v829, %v1086
        %v1151 = vadd.f32 %v830, %v1087
        %v1152 = vadd.f32 %v831, %v1088
        %v1153 = vadd.f32 %v832, %v1089
        %v1154 = vadd.f32 %v833, %v1090
        %v1155 = vld [vmem:[%s834 + $0x1] sm:$0x1]
        %v1156 = vld [vmem:[%s834 + $0x3] sm:$0x1]
        %v1157 = vld [vmem:[%s834 + $0x5] sm:$0x1]
        %v1158 = vld [vmem:[%s834 + $0x7] sm:$0x1]
        %v1159 = vld [vmem:[%s834 + $0x9] sm:$0x1]
        %v1160 = vld [vmem:[%s834 + $0xb] sm:$0x1]
        %v1161 = vld [vmem:[%s834 + $0xd] sm:$0x1]
        %v1162 = vld [vmem:[%s834 + $0xf] sm:$0x1]
        %v1163 = vld [vmem:[%s834 + $0x21] sm:$0x1]
        %v1164 = vld [vmem:[%s834 + $0x23] sm:$0x1]
        %v1165 = vld [vmem:[%s834 + $0x25] sm:$0x1]
        %v1166 = vld [vmem:[%s834 + $0x27] sm:$0x1]
        %v1167 = vld [vmem:[%s834 + $0x29] sm:$0x1]
        %v1168 = vld [vmem:[%s834 + $0x2b] sm:$0x1]
        %v1169 = vld [vmem:[%s834 + $0x2d] sm:$0x1]
        %v1170 = vld [vmem:[%s834 + $0x2f] sm:$0x1]
        %v1171 = vld [vmem:[%s834 + $0x41] sm:$0x1]
        %v1172 = vld [vmem:[%s834 + $0x43] sm:$0x1]
        %v1173 = vld [vmem:[%s834 + $0x45] sm:$0x1]
        %v1174 = vld [vmem:[%s834 + $0x47] sm:$0x1]
        %v1175 = vld [vmem:[%s834 + $0x49] sm:$0x1]
        %v1176 = vld [vmem:[%s834 + $0x4b] sm:$0x1]
        %v1177 = vld [vmem:[%s834 + $0x4d] sm:$0x1]
        %v1178 = vld [vmem:[%s834 + $0x4f] sm:$0x1]
        %v1179 = vld [vmem:[%s834 + $0x61] sm:$0x1]
        %v1180 = vld [vmem:[%s834 + $0x63] sm:$0x1]
        %v1181 = vld [vmem:[%s834 + $0x65] sm:$0x1]
        %v1182 = vld [vmem:[%s834 + $0x67] sm:$0x1]
        %v1183 = vld [vmem:[%s834 + $0x69] sm:$0x1]
        %v1184 = vld [vmem:[%s834 + $0x6b] sm:$0x1]
        %v1185 = vld [vmem:[%s834 + $0x6d] sm:$0x1]
        %v1186 = vld [vmem:[%s834 + $0x6f] sm:$0x1]
        %v1187 = vld [vmem:[%s834 + $0x81] sm:$0x1]
        %v1188 = vld [vmem:[%s834 + $0x83] sm:$0x1]
        %v1189 = vld [vmem:[%s834 + $0x85] sm:$0x1]
        %v1190 = vld [vmem:[%s834 + $0x87] sm:$0x1]
        %v1191 = vld [vmem:[%s834 + $0x89] sm:$0x1]
        %v1192 = vld [vmem:[%s834 + $0x8b] sm:$0x1]
        %v1193 = vld [vmem:[%s834 + $0x8d] sm:$0x1]
        %v1194 = vld [vmem:[%s834 + $0x8f] sm:$0x1]
        %v1195 = vld [vmem:[%s834 + $0xa1] sm:$0x1]
        %v1196 = vld [vmem:[%s834 + $0xa3] sm:$0x1]
        %v1197 = vld [vmem:[%s834 + $0xa5] sm:$0x1]
        %v1198 = vld [vmem:[%s834 + $0xa7] sm:$0x1]
        %v1199 = vld [vmem:[%s834 + $0xa9] sm:$0x1]
        %v1200 = vld [vmem:[%s834 + $0xab] sm:$0x1]
        %v1201 = vld [vmem:[%s834 + $0xad] sm:$0x1]
        %v1202 = vld [vmem:[%s834 + $0xaf] sm:$0x1]
        %v1203 = vld [vmem:[%s834 + $0xc1] sm:$0x1]
        %v1204 = vld [vmem:[%s834 + $0xc3] sm:$0x1]
        %v1205 = vld [vmem:[%s834 + $0xc5] sm:$0x1]
        %v1206 = vld [vmem:[%s834 + $0xc7] sm:$0x1]
        %v1207 = vld [vmem:[%s834 + $0xc9] sm:$0x1]
        %v1208 = vld [vmem:[%s834 + $0xcb] sm:$0x1]
        %v1209 = vld [vmem:[%s834 + $0xcd] sm:$0x1]
        %v1210 = vld [vmem:[%s834 + $0xcf] sm:$0x1]
        %v1211 = vld [vmem:[%s834 + $0xe1] sm:$0x1]
        %v1212 = vld [vmem:[%s834 + $0xe3] sm:$0x1]
        %v1213 = vld [vmem:[%s834 + $0xe5] sm:$0x1]
        %v1214 = vld [vmem:[%s834 + $0xe7] sm:$0x1]
        %v1215 = vld [vmem:[%s834 + $0xe9] sm:$0x1]
        %v1216 = vld [vmem:[%s834 + $0xeb] sm:$0x1]
        %v1217 = vld [vmem:[%s834 + $0xed] sm:$0x1]
        %v1218 = vld [vmem:[%s834 + $0xef] sm:$0x1]
        %v1219 = vmul.f32 %v1155, %v317
        %v1220 = vmul.f32 %v1156, %v317
        %v1221 = vmul.f32 %v1157, %v317
        %v1222 = vmul.f32 %v1158, %v317
        %v1223 = vmul.f32 %v1159, %v317
        %v1224 = vmul.f32 %v1160, %v317
        %v1225 = vmul.f32 %v1161, %v317
        %v1226 = vmul.f32 %v1162, %v317
        %v1227 = vmul.f32 %v1163, %v317
        %v1228 = vmul.f32 %v1164, %v317
        %v1229 = vmul.f32 %v1165, %v317
        %v1230 = vmul.f32 %v1166, %v317
        %v1231 = vmul.f32 %v1167, %v317
        %v1232 = vmul.f32 %v1168, %v317
        %v1233 = vmul.f32 %v1169, %v317
        %v1234 = vmul.f32 %v1170, %v317
        %v1235 = vmul.f32 %v1171, %v317
        %v1236 = vmul.f32 %v1172, %v317
        %v1237 = vmul.f32 %v1173, %v317
        %v1238 = vmul.f32 %v1174, %v317
        %v1239 = vmul.f32 %v1175, %v317
        %v1240 = vmul.f32 %v1176, %v317
        %v1241 = vmul.f32 %v1177, %v317
        %v1242 = vmul.f32 %v1178, %v317
        %v1243 = vmul.f32 %v1179, %v317
        %v1244 = vmul.f32 %v1180, %v317
        %v1245 = vmul.f32 %v1181, %v317
        %v1246 = vmul.f32 %v1182, %v317
        %v1247 = vmul.f32 %v1183, %v317
        %v1248 = vmul.f32 %v1184, %v317
        %v1249 = vmul.f32 %v1185, %v317
        %v1250 = vmul.f32 %v1186, %v317
        %v1251 = vmul.f32 %v1187, %v317
        %v1252 = vmul.f32 %v1188, %v317
        %v1253 = vmul.f32 %v1189, %v317
        %v1254 = vmul.f32 %v1190, %v317
        %v1255 = vmul.f32 %v1191, %v317
        %v1256 = vmul.f32 %v1192, %v317
        %v1257 = vmul.f32 %v1193, %v317
        %v1258 = vmul.f32 %v1194, %v317
        %v1259 = vmul.f32 %v1195, %v317
        %v1260 = vmul.f32 %v1196, %v317
        %v1261 = vmul.f32 %v1197, %v317
        %v1262 = vmul.f32 %v1198, %v317
        %v1263 = vmul.f32 %v1199, %v317
        %v1264 = vmul.f32 %v1200, %v317
        %v1265 = vmul.f32 %v1201, %v317
        %v1266 = vmul.f32 %v1202, %v317
        %v1267 = vmul.f32 %v1203, %v317
        %v1268 = vmul.f32 %v1204, %v317
        %v1269 = vmul.f32 %v1205, %v317
        %v1270 = vmul.f32 %v1206, %v317
        %v1271 = vmul.f32 %v1207, %v317
        %v1272 = vmul.f32 %v1208, %v317
        %v1273 = vmul.f32 %v1209, %v317
        %v1274 = vmul.f32 %v1210, %v317
        %v1275 = vmul.f32 %v1211, %v317
        %v1276 = vmul.f32 %v1212, %v317
        %v1277 = vmul.f32 %v1213, %v317
        %v1278 = vmul.f32 %v1214, %v317
        %v1279 = vmul.f32 %v1215, %v317
        %v1280 = vmul.f32 %v1216, %v317
        %v1281 = vmul.f32 %v1217, %v317
        %v1282 = vmul.f32 %v1218, %v317
        %v1283 = vadd.f32 %v1219, %v384
        %v1284 = vadd.f32 %v1220, %v384
        %v1285 = vadd.f32 %v1221, %v384
        %v1286 = vadd.f32 %v1222, %v384
        %v1287 = vadd.f32 %v1223, %v384
        %v1288 = vadd.f32 %v1224, %v384
        %v1289 = vadd.f32 %v1225, %v384
        %v1290 = vadd.f32 %v1226, %v384
        %v1291 = vadd.f32 %v1227, %v384
        %v1292 = vadd.f32 %v1228, %v384
        %v1293 = vadd.f32 %v1229, %v384
        %v1294 = vadd.f32 %v1230, %v384
        %v1295 = vadd.f32 %v1231, %v384
        %v1296 = vadd.f32 %v1232, %v384
        %v1297 = vadd.f32 %v1233, %v384
        %v1298 = vadd.f32 %v1234, %v384
        %v1299 = vadd.f32 %v1235, %v384
        %v1300 = vadd.f32 %v1236, %v384
        %v1301 = vadd.f32 %v1237, %v384
        %v1302 = vadd.f32 %v1238, %v384
        %v1303 = vadd.f32 %v1239, %v384
        %v1304 = vadd.f32 %v1240, %v384
        %v1305 = vadd.f32 %v1241, %v384
        %v1306 = vadd.f32 %v1242, %v384
        %v1307 = vadd.f32 %v1243, %v384
        %v1308 = vadd.f32 %v1244, %v384
        %v1309 = vadd.f32 %v1245, %v384
        %v1310 = vadd.f32 %v1246, %v384
        %v1311 = vadd.f32 %v1247, %v384
        %v1312 = vadd.f32 %v1248, %v384
        %v1313 = vadd.f32 %v1249, %v384
        %v1314 = vadd.f32 %v1250, %v384
        %v1315 = vadd.f32 %v1251, %v384
        %v1316 = vadd.f32 %v1252, %v384
        %v1317 = vadd.f32 %v1253, %v384
        %v1318 = vadd.f32 %v1254, %v384
        %v1319 = vadd.f32 %v1255, %v384
        %v1320 = vadd.f32 %v1256, %v384
        %v1321 = vadd.f32 %v1257, %v384
        %v1322 = vadd.f32 %v1258, %v384
        %v1323 = vadd.f32 %v1259, %v384
        %v1324 = vadd.f32 %v1260, %v384
        %v1325 = vadd.f32 %v1261, %v384
        %v1326 = vadd.f32 %v1262, %v384
        %v1327 = vadd.f32 %v1263, %v384
        %v1328 = vadd.f32 %v1264, %v384
        %v1329 = vadd.f32 %v1265, %v384
        %v1330 = vadd.f32 %v1266, %v384
        %v1331 = vadd.f32 %v1267, %v384
        %v1332 = vadd.f32 %v1268, %v384
        %v1333 = vadd.f32 %v1269, %v384
        %v1334 = vadd.f32 %v1270, %v384
        %v1335 = vadd.f32 %v1271, %v384
        %v1336 = vadd.f32 %v1272, %v384
        %v1337 = vadd.f32 %v1273, %v384
        %v1338 = vadd.f32 %v1274, %v384
        %v1339 = vadd.f32 %v1275, %v384
        %v1340 = vadd.f32 %v1276, %v384
        %v1341 = vadd.f32 %v1277, %v384
        %v1342 = vadd.f32 %v1278, %v384
        %v1343 = vadd.f32 %v1279, %v384
        %v1344 = vadd.f32 %v1280, %v384
        %v1345 = vadd.f32 %v1281, %v384
        %v1346 = vadd.f32 %v1282, %v384
        %v1347 = vmax.f32 %v1283, 0.0
        %v1348 = vmax.f32 %v1284, 0.0
        %v1349 = vmax.f32 %v1285, 0.0
        %v1350 = vmax.f32 %v1286, 0.0
        %v1351 = vmax.f32 %v1287, 0.0
        %v1352 = vmax.f32 %v1288, 0.0
        %v1353 = vmax.f32 %v1289, 0.0
        %v1354 = vmax.f32 %v1290, 0.0
        %v1355 = vmax.f32 %v1291, 0.0
        %v1356 = vmax.f32 %v1292, 0.0
        %v1357 = vmax.f32 %v1293, 0.0
        %v1358 = vmax.f32 %v1294, 0.0
        %v1359 = vmax.f32 %v1295, 0.0
        %v1360 = vmax.f32 %v1296, 0.0
        %v1361 = vmax.f32 %v1297, 0.0
        %v1362 = vmax.f32 %v1298, 0.0
        %v1363 = vmax.f32 %v1299, 0.0
        %v1364 = vmax.f32 %v1300, 0.0
        %v1365 = vmax.f32 %v1301, 0.0
        %v1366 = vmax.f32 %v1302, 0.0
        %v1367 = vmax.f32 %v1303, 0.0
        %v1368 = vmax.f32 %v1304, 0.0
        %v1369 = vmax.f32 %v1305, 0.0
        %v1370 = vmax.f32 %v1306, 0.0
        %v1371 = vmax.f32 %v1307, 0.0
        %v1372 = vmax.f32 %v1308, 0.0
        %v1373 = vmax.f32 %v1309, 0.0
        %v1374 = vmax.f32 %v1310, 0.0
        %v1375 = vmax.f32 %v1311, 0.0
        %v1376 = vmax.f32 %v1312, 0.0
        %v1377 = vmax.f32 %v1313, 0.0
        %v1378 = vmax.f32 %v1314, 0.0
        %v1379 = vmax.f32 %v1315, 0.0
        %v1380 = vmax.f32 %v1316, 0.0
        %v1381 = vmax.f32 %v1317, 0.0
        %v1382 = vmax.f32 %v1318, 0.0
        %v1383 = vmax.f32 %v1319, 0.0
        %v1384 = vmax.f32 %v1320, 0.0
        %v1385 = vmax.f32 %v1321, 0.0
        %v1386 = vmax.f32 %v1322, 0.0
        %v1387 = vmax.f32 %v1323, 0.0
        %v1388 = vmax.f32 %v1324, 0.0
        %v1389 = vmax.f32 %v1325, 0.0
        %v1390 = vmax.f32 %v1326, 0.0
        %v1391 = vmax.f32 %v1327, 0.0
        %v1392 = vmax.f32 %v1328, 0.0
        %v1393 = vmax.f32 %v1329, 0.0
        %v1394 = vmax.f32 %v1330, 0.0
        %v1395 = vmax.f32 %v1331, 0.0
        %v1396 = vmax.f32 %v1332, 0.0
        %v1397 = vmax.f32 %v1333, 0.0
        %v1398 = vmax.f32 %v1334, 0.0
        %v1399 = vmax.f32 %v1335, 0.0
        %v1400 = vmax.f32 %v1336, 0.0
        %v1401 = vmax.f32 %v1337, 0.0
        %v1402 = vmax.f32 %v1338, 0.0
        %v1403 = vmax.f32 %v1339, 0.0
        %v1404 = vmax.f32 %v1340, 0.0
        %v1405 = vmax.f32 %v1341, 0.0
        %v1406 = vmax.f32 %v1342, 0.0
        %v1407 = vmax.f32 %v1343, 0.0
        %v1408 = vmax.f32 %v1344, 0.0
        %v1409 = vmax.f32 %v1345, 0.0
        %v1410 = vmax.f32 %v1346, 0.0
        %v1411 = vadd.f32 %v1091, %v1347
        %v1412 = vadd.f32 %v1092, %v1348
        %v1413 = vadd.f32 %v1093, %v1349
        %v1414 = vadd.f32 %v1094, %v1350
        %v1415 = vadd.f32 %v1095, %v1351
        %v1416 = vadd.f32 %v1096, %v1352
        %v1417 = vadd.f32 %v1097, %v1353
        %v1418 = vadd.f32 %v1098, %v1354
        %v1419 = vadd.f32 %v1099, %v1355
        %v1420 = vadd.f32 %v1100, %v1356
        %v1421 = vadd.f32 %v1101, %v1357
        %v1422 = vadd.f32 %v1102, %v1358
        %v1423 = vadd.f32 %v1103, %v1359
        %v1424 = vadd.f32 %v1104, %v1360
        %v1425 = vadd.f32 %v1105, %v1361
        %v1426 = vadd.f32 %v1106, %v1362
        %v1427 = vadd.f32 %v1107, %v1363
        %v1428 = vadd.f32 %v1108, %v1364
        %v1429 = vadd.f32 %v1109, %v1365
        %v1430 = vadd.f32 %v1110, %v1366
        %v1431 = vadd.f32 %v1111, %v1367
        %v1432 = vadd.f32 %v1112, %v1368
        %v1433 = vadd.f32 %v1113, %v1369
        %v1434 = vadd.f32 %v1114, %v1370
        %v1435 = vadd.f32 %v1115, %v1371
        %v1436 = vadd.f32 %v1116, %v1372
        %v1437 = vadd.f32 %v1117, %v1373
        %v1438 = vadd.f32 %v1118, %v1374
        %v1439 = vadd.f32 %v1119, %v1375
        %v1440 = vadd.f32 %v1120, %v1376
        %v1441 = vadd.f32 %v1121, %v1377
        %v1442 = vadd.f32 %v1122, %v1378
        %v1443 = vadd.f32 %v1123, %v1379
        %v1444 = vadd.f32 %v1124, %v1380
        %v1445 = vadd.f32 %v1125, %v1381
        %v1446 = vadd.f32 %v1126, %v1382
        %v1447 = vadd.f32 %v1127, %v1383
        %v1448 = vadd.f32 %v1128, %v1384
        %v1449 = vadd.f32 %v1129, %v1385
        %v1450 = vadd.f32 %v1130, %v1386
        %v1451 = vadd.f32 %v1131, %v1387
        %v1452 = vadd.f32 %v1132, %v1388
        %v1453 = vadd.f32 %v1133, %v1389
        %v1454 = vadd.f32 %v1134, %v1390
        %v1455 = vadd.f32 %v1135, %v1391
        %v1456 = vadd.f32 %v1136, %v1392
        %v1457 = vadd.f32 %v1137, %v1393
        %v1458 = vadd.f32 %v1138, %v1394
        %v1459 = vadd.f32 %v1139, %v1395
        %v1460 = vadd.f32 %v1140, %v1396
        %v1461 = vadd.f32 %v1141, %v1397
        %v1462 = vadd.f32 %v1142, %v1398
        %v1463 = vadd.f32 %v1143, %v1399
        %v1464 = vadd.f32 %v1144, %v1400
        %v1465 = vadd.f32 %v1145, %v1401
        %v1466 = vadd.f32 %v1146, %v1402
        %v1467 = vadd.f32 %v1147, %v1403
        %v1468 = vadd.f32 %v1148, %v1404
        %v1469 = vadd.f32 %v1149, %v1405
        %v1470 = vadd.f32 %v1150, %v1406
        %v1471 = vadd.f32 %v1151, %v1407
        %v1472 = vadd.f32 %v1152, %v1408
        %v1473 = vadd.f32 %v1153, %v1409
        %v1474 = vadd.f32 %v1154, %v1410
        %v1475 = vpack.c.bf16 %v1411, %v1411
        %v1476 = vpack.c.bf16 %v1412, %v1412
        %v1477 = vpack.c.bf16 %v1413, %v1413
        %v1478 = vpack.c.bf16 %v1414, %v1414
        %v1479 = vpack.c.bf16 %v1415, %v1415
        %v1480 = vpack.c.bf16 %v1416, %v1416
        %v1481 = vpack.c.bf16 %v1417, %v1417
        %v1482 = vpack.c.bf16 %v1418, %v1418
        %v1483 = vpack.c.bf16 %v1419, %v1419
        %v1484 = vpack.c.bf16 %v1420, %v1420
        %v1485 = vpack.c.bf16 %v1421, %v1421
        %v1486 = vpack.c.bf16 %v1422, %v1422
        %v1487 = vpack.c.bf16 %v1423, %v1423
        %v1488 = vpack.c.bf16 %v1424, %v1424
        %v1489 = vpack.c.bf16 %v1425, %v1425
        %v1490 = vpack.c.bf16 %v1426, %v1426
        %v1491 = vpack.c.bf16 %v1427, %v1427
        %v1492 = vpack.c.bf16 %v1428, %v1428
        %v1493 = vpack.c.bf16 %v1429, %v1429
        %v1494 = vpack.c.bf16 %v1430, %v1430
        %v1495 = vpack.c.bf16 %v1431, %v1431
        %v1496 = vpack.c.bf16 %v1432, %v1432
        %v1497 = vpack.c.bf16 %v1433, %v1433
        %v1498 = vpack.c.bf16 %v1434, %v1434
        %v1499 = vpack.c.bf16 %v1435, %v1435
        %v1500 = vpack.c.bf16 %v1436, %v1436
        %v1501 = vpack.c.bf16 %v1437, %v1437
        %v1502 = vpack.c.bf16 %v1438, %v1438
        %v1503 = vpack.c.bf16 %v1439, %v1439
        %v1504 = vpack.c.bf16 %v1440, %v1440
        %v1505 = vpack.c.bf16 %v1441, %v1441
        %v1506 = vpack.c.bf16 %v1442, %v1442
        %v1507 = vpack.c.bf16 %v1443, %v1443
        %v1508 = vpack.c.bf16 %v1444, %v1444
        %v1509 = vpack.c.bf16 %v1445, %v1445
        %v1510 = vpack.c.bf16 %v1446, %v1446
        %v1511 = vpack.c.bf16 %v1447, %v1447
        %v1512 = vpack.c.bf16 %v1448, %v1448
        %v1513 = vpack.c.bf16 %v1449, %v1449
        %v1514 = vpack.c.bf16 %v1450, %v1450
        %v1515 = vpack.c.bf16 %v1451, %v1451
        %v1516 = vpack.c.bf16 %v1452, %v1452
        %v1517 = vpack.c.bf16 %v1453, %v1453
        %v1518 = vpack.c.bf16 %v1454, %v1454
        %v1519 = vpack.c.bf16 %v1455, %v1455
        %v1520 = vpack.c.bf16 %v1456, %v1456
        %v1521 = vpack.c.bf16 %v1457, %v1457
        %v1522 = vpack.c.bf16 %v1458, %v1458
        %v1523 = vpack.c.bf16 %v1459, %v1459
        %v1524 = vpack.c.bf16 %v1460, %v1460
        %v1525 = vpack.c.bf16 %v1461, %v1461
        %v1526 = vpack.c.bf16 %v1462, %v1462
        %v1527 = vpack.c.bf16 %v1463, %v1463
        %v1528 = vpack.c.bf16 %v1464, %v1464
        %v1529 = vpack.c.bf16 %v1465, %v1465
        %v1530 = vpack.c.bf16 %v1466, %v1466
        %v1531 = vpack.c.bf16 %v1467, %v1467
        %v1532 = vpack.c.bf16 %v1468, %v1468
        %v1533 = vpack.c.bf16 %v1469, %v1469
        %v1534 = vpack.c.bf16 %v1470, %v1470
        %v1535 = vpack.c.bf16 %v1471, %v1471
        %v1536 = vpack.c.bf16 %v1472, %v1472
        %v1537 = vpack.c.bf16 %v1473, %v1473
        %v1538 = vpack.c.bf16 %v1474, %v1474
        %v1539 = vld [vmem:[%s3] sm:$0xf]
        %v1604 = vunpack.c.l.b16 %v1475
        %v1605 = vunpack.c.l.b16 %v1476
        %v1606 = vunpack.c.l.b16 %v1477
        %v1607 = vunpack.c.l.b16 %v1478
        %v1608 = vunpack.c.l.b16 %v1479
        %v1609 = vunpack.c.l.b16 %v1480
        %v1610 = vunpack.c.l.b16 %v1481
        %v1611 = vunpack.c.l.b16 %v1482
        %v1612 = vunpack.c.l.b16 %v1483
        %v1613 = vunpack.c.l.b16 %v1484
        %v1614 = vunpack.c.l.b16 %v1485
        %v1615 = vunpack.c.l.b16 %v1486
        %v1616 = vunpack.c.l.b16 %v1487
        %v1617 = vunpack.c.l.b16 %v1488
        %v1618 = vunpack.c.l.b16 %v1489
        %v1619 = vunpack.c.l.b16 %v1490
        %v1620 = vunpack.c.l.b16 %v1491
        %v1621 = vunpack.c.l.b16 %v1492
        %v1622 = vunpack.c.l.b16 %v1493
        %v1623 = vunpack.c.l.b16 %v1494
        %v1624 = vunpack.c.l.b16 %v1495
        %v1625 = vunpack.c.l.b16 %v1496
        %v1626 = vunpack.c.l.b16 %v1497
        %v1627 = vunpack.c.l.b16 %v1498
        %v1628 = vunpack.c.l.b16 %v1499
        %v1629 = vunpack.c.l.b16 %v1500
        %v1630 = vunpack.c.l.b16 %v1501
        %v1631 = vunpack.c.l.b16 %v1502
        %v1632 = vunpack.c.l.b16 %v1503
        %v1633 = vunpack.c.l.b16 %v1504
        %v1634 = vunpack.c.l.b16 %v1505
        %v1635 = vunpack.c.l.b16 %v1506
        %v1636 = vunpack.c.l.b16 %v1507
        %v1637 = vunpack.c.l.b16 %v1508
        %v1638 = vunpack.c.l.b16 %v1509
        %v1639 = vunpack.c.l.b16 %v1510
        %v1640 = vunpack.c.l.b16 %v1511
        %v1641 = vunpack.c.l.b16 %v1512
        %v1642 = vunpack.c.l.b16 %v1513
        %v1643 = vunpack.c.l.b16 %v1514
        %v1644 = vunpack.c.l.b16 %v1515
        %v1645 = vunpack.c.l.b16 %v1516
        %v1646 = vunpack.c.l.b16 %v1517
        %v1647 = vunpack.c.l.b16 %v1518
        %v1648 = vunpack.c.l.b16 %v1519
        %v1649 = vunpack.c.l.b16 %v1520
        %v1650 = vunpack.c.l.b16 %v1521
        %v1651 = vunpack.c.l.b16 %v1522
        %v1652 = vunpack.c.l.b16 %v1523
        %v1653 = vunpack.c.l.b16 %v1524
        %v1654 = vunpack.c.l.b16 %v1525
        %v1655 = vunpack.c.l.b16 %v1526
        %v1656 = vunpack.c.l.b16 %v1527
        %v1657 = vunpack.c.l.b16 %v1528
        %v1658 = vunpack.c.l.b16 %v1529
        %v1659 = vunpack.c.l.b16 %v1530
        %v1660 = vunpack.c.l.b16 %v1531
        %v1661 = vunpack.c.l.b16 %v1532
        %v1662 = vunpack.c.l.b16 %v1533
        %v1663 = vunpack.c.l.b16 %v1534
        %v1664 = vunpack.c.l.b16 %v1535
        %v1665 = vunpack.c.l.b16 %v1536
        %v1666 = vunpack.c.l.b16 %v1537
        %v1667 = vunpack.c.l.b16 %v1538
        %v1668 = vrot.slane %v1605, 7
        %vm1669 = vcmask 1041409
        %v1670 = vsel %vm1669, %v1668, %v1604
        %v1671 = vrot.slane %v1606, 6
        %vm1672 = vcmask 1042434
        %v1673 = vsel %vm1672, %v1671, %v1670
        %v1674 = vrot.slane %v1607, 5
        %vm1675 = vcmask 1043459
        %v1676 = vsel %vm1675, %v1674, %v1673
        %v1677 = vrot.slane %v1608, 4
        %vm1678 = vcmask 1044484
        %v1679 = vsel %vm1678, %v1677, %v1676
        %v1680 = vrot.slane %v1609, 3
        %vm1681 = vcmask 1045509
        %v1682 = vsel %vm1681, %v1680, %v1679
        %v1683 = vrot.slane %v1610, 2
        %vm1684 = vcmask 1046534
        %v1685 = vsel %vm1684, %v1683, %v1682
        %v1686 = vrot.slane %v1611, 1
        %vm1687 = vcmask 1047559
        %v1688 = vsel %vm1687, %v1686, %v1685
        %v1689 = vrot.slane %v1613, 7
        %v1690 = vsel %vm1669, %v1689, %v1612
        %v1691 = vrot.slane %v1614, 6
        %v1692 = vsel %vm1672, %v1691, %v1690
        %v1693 = vrot.slane %v1615, 5
        %v1694 = vsel %vm1675, %v1693, %v1692
        %v1695 = vrot.slane %v1616, 4
        %v1696 = vsel %vm1678, %v1695, %v1694
        %v1697 = vrot.slane %v1617, 3
        %v1698 = vsel %vm1681, %v1697, %v1696
        %v1699 = vrot.slane %v1618, 2
        %v1700 = vsel %vm1684, %v1699, %v1698
        %v1701 = vrot.slane %v1619, 1
        %v1702 = vsel %vm1687, %v1701, %v1700
        %v1703 = vrot.slane %v1621, 7
        %v1704 = vsel %vm1669, %v1703, %v1620
        %v1705 = vrot.slane %v1622, 6
        %v1706 = vsel %vm1672, %v1705, %v1704
        %v1707 = vrot.slane %v1623, 5
        %v1708 = vsel %vm1675, %v1707, %v1706
        %v1709 = vrot.slane %v1624, 4
        %v1710 = vsel %vm1678, %v1709, %v1708
        %v1711 = vrot.slane %v1625, 3
        %v1712 = vsel %vm1681, %v1711, %v1710
        %v1713 = vrot.slane %v1626, 2
        %v1714 = vsel %vm1684, %v1713, %v1712
        %v1715 = vrot.slane %v1627, 1
        %v1716 = vsel %vm1687, %v1715, %v1714
        %v1717 = vrot.slane %v1629, 7
        %v1718 = vsel %vm1669, %v1717, %v1628
        %v1719 = vrot.slane %v1630, 6
        %v1720 = vsel %vm1672, %v1719, %v1718
        %v1721 = vrot.slane %v1631, 5
        %v1722 = vsel %vm1675, %v1721, %v1720
        %v1723 = vrot.slane %v1632, 4
        %v1724 = vsel %vm1678, %v1723, %v1722
        %v1725 = vrot.slane %v1633, 3
        %v1726 = vsel %vm1681, %v1725, %v1724
        %v1727 = vrot.slane %v1634, 2
        %v1728 = vsel %vm1684, %v1727, %v1726
        %v1729 = vrot.slane %v1635, 1
        %v1730 = vsel %vm1687, %v1729, %v1728
        %v1731 = vrot.slane %v1637, 7
        %v1732 = vsel %vm1669, %v1731, %v1636
        %v1733 = vrot.slane %v1638, 6
        %v1734 = vsel %vm1672, %v1733, %v1732
        %v1735 = vrot.slane %v1639, 5
        %v1736 = vsel %vm1675, %v1735, %v1734
        %v1737 = vrot.slane %v1640, 4
        %v1738 = vsel %vm1678, %v1737, %v1736
        %v1739 = vrot.slane %v1641, 3
        %v1740 = vsel %vm1681, %v1739, %v1738
        %v1741 = vrot.slane %v1642, 2
        %v1742 = vsel %vm1684, %v1741, %v1740
        %v1743 = vrot.slane %v1643, 1
        %v1744 = vsel %vm1687, %v1743, %v1742
        %v1745 = vrot.slane %v1645, 7
        %v1746 = vsel %vm1669, %v1745, %v1644
        %v1747 = vrot.slane %v1646, 6
        %v1748 = vsel %vm1672, %v1747, %v1746
        %v1749 = vrot.slane %v1647, 5
        %v1750 = vsel %vm1675, %v1749, %v1748
        %v1751 = vrot.slane %v1648, 4
        %v1752 = vsel %vm1678, %v1751, %v1750
        %v1753 = vrot.slane %v1649, 3
        %v1754 = vsel %vm1681, %v1753, %v1752
        %v1755 = vrot.slane %v1650, 2
        %v1756 = vsel %vm1684, %v1755, %v1754
        %v1757 = vrot.slane %v1651, 1
        %v1758 = vsel %vm1687, %v1757, %v1756
        %v1759 = vrot.slane %v1653, 7
        %v1760 = vsel %vm1669, %v1759, %v1652
        %v1761 = vrot.slane %v1654, 6
        %v1762 = vsel %vm1672, %v1761, %v1760
        %v1763 = vrot.slane %v1655, 5
        %v1764 = vsel %vm1675, %v1763, %v1762
        %v1765 = vrot.slane %v1656, 4
        %v1766 = vsel %vm1678, %v1765, %v1764
        %v1767 = vrot.slane %v1657, 3
        %v1768 = vsel %vm1681, %v1767, %v1766
        %v1769 = vrot.slane %v1658, 2
        %v1770 = vsel %vm1684, %v1769, %v1768
        %v1771 = vrot.slane %v1659, 1
        %v1772 = vsel %vm1687, %v1771, %v1770
        %v1773 = vrot.slane %v1661, 7
        %v1774 = vsel %vm1669, %v1773, %v1660
        %v1775 = vrot.slane %v1662, 6
        %v1776 = vsel %vm1672, %v1775, %v1774
        %v1777 = vrot.slane %v1663, 5
        %v1778 = vsel %vm1675, %v1777, %v1776
        %v1779 = vrot.slane %v1664, 4
        %v1780 = vsel %vm1678, %v1779, %v1778
        %v1781 = vrot.slane %v1665, 3
        %v1782 = vsel %vm1681, %v1781, %v1780
        %v1783 = vrot.slane %v1666, 2
        %v1784 = vsel %vm1684, %v1783, %v1782
        %v1785 = vrot.slane %v1667, 1
        %v1786 = vsel %vm1687, %v1785, %v1784
        %v1787 = vpack.c.b16 %v1702, %v1688
        %v1788 = vpack.c.b16 %v1730, %v1716
        %v1789 = vpack.c.b16 %v1758, %v1744
        %v1790 = vpack.c.b16 %v1786, %v1772
        %vm1791 = vcmask 64512
        %v1793 = vsel %vm1791, %v1787, 0
        %v1796 = vsel %vm1791, %v1788, 0
        %v1799 = vsel %vm1791, %v1789, 0
        %v1802 = vsel %vm1791, %v1790, 0
        %vm1804 = vcmask 1043456
        %v1806 = vsel %vm1804, %v1539, 0
        %1808 = vmatpush.bf16.msra.mxu0 0
        %1809 = vmatpush.bf16.msra.mxu0 0
        %1810 = vmatpush.bf16.msra.mxu0 0
        %1811 = vmatpush.bf16.msra.mxu0 0
        %1812 = vmatpush.bf16.msra.mxu0 0
        %1813 = vmatpush.bf16.msra.mxu0 0
        %1814 = vmatpush.bf16.msra.mxu0 0
        %1815 = vmatpush.bf16.msra.mxu0 %v1806
        %1816 = vmatmul.bf16.gmra.mxu0 %v1793
        %v1817 = vpop.f32.mrf.mxu0
        %v1818 = vadd.f32 0.0, %v1817
        %v1819 = vpop.f32.mrf.mxu0
        %v1820 = vadd.f32 0.0, %v1819
        %1821 = vmatmul.bf16.gmra.mxu0 %v1796
        %v1822 = vpop.f32.mrf.mxu0
        %v1823 = vadd.f32 0.0, %v1822
        %v1824 = vpop.f32.mrf.mxu0
        %v1825 = vadd.f32 0.0, %v1824
        %1826 = vmatmul.bf16.gmra.mxu0 %v1799
        %v1827 = vpop.f32.mrf.mxu0
        %v1828 = vadd.f32 0.0, %v1827
        %v1829 = vpop.f32.mrf.mxu0
        %v1830 = vadd.f32 0.0, %v1829
        %1831 = vmatmul.bf16.gmra.mxu0 %v1802
        %v1832 = vpop.f32.mrf.mxu0
        %v1833 = vadd.f32 0.0, %v1832
        %v1834 = vpop.f32.mrf.mxu0
        %v1835 = vadd.f32 0.0, %v1834
        %1836 = vdwg.mxu0
        %vm1837 = vcmask 31744
        %1838 = vst.msk [vmem:[%s247] sm:$0xff] %vm1837, %v1818
        %1839 = vst.msk [vmem:[%s247 + $0x8] sm:$0xff] %vm1837, %v1820
        %1840 = vst.msk [vmem:[%s247 + $0x10] sm:$0xff] %vm1837, %v1823
        %1841 = vst.msk [vmem:[%s247 + $0x18] sm:$0xff] %vm1837, %v1825
        %1842 = vst.msk [vmem:[%s247 + $0x20] sm:$0xff] %vm1837, %v1828
        %1843 = vst.msk [vmem:[%s247 + $0x28] sm:$0xff] %vm1837, %v1830
        %1844 = vst.msk [vmem:[%s247 + $0x30] sm:$0xff] %vm1837, %v1833
        %1845 = vst.msk [vmem:[%s247 + $0x38] sm:$0xff] %vm1837, %v1835
        %s1846 = smul.u32 8, %s23
        %p1847 = scmp.lt.s32.totalorder %s22, 1
        %s1848 = scalar_select %p1847, %s22, 1
        %p1849 = scmp.lt.s32.totalorder %s1846, 7
        %s1850 = scalar_select %p1849, %s1846, 7
        %s1851 = smul.addr %s1848, 8
        %s1852 = sadd.s32 %s1850, %s1851
        %s1853 = smul.addr %s1852, 8
        %s1854 = scalar_lea.vmem %s4, %s1853
        // Predicated region
        $region41: #{tpu_custom_call.1} parent=35 // pred_check
          %p1855 = pneg %p141
        $region42: #{tpu_custom_call.1} parent=35 // pred_check_branch
          %1857 = sbr.rel (%p1855) target = $region44
        $region43: #{tpu_custom_call.1} parent=35 // pred_region
          %s1858 = smul.u32 8, %s23
        $region44: #{tpu_custom_call.1} parent=35 // pred_fallthru
          _
      $region36: #{tpu_custom_call.1} parent=5 // pred_fallthru
        _
      %p1859 = scmp.le.s32.totalorder 2, %s13
      // Predicated region
      $region45: #{tpu_custom_call.1} parent=5 // pred_check
        %p1860 = pneg %p1859
      $region46: #{tpu_custom_call.1} parent=5 // pred_check_branch
        %1862 = sbr.rel (%p1860) target = $region48
      $region47: #{tpu_custom_call.1} parent=5 // pred_region
        %s1863 = ssub.s32 %s13, 2
        // Predicated region
        $region49: #{tpu_custom_call.1} parent=47 // pred_check
          %p1864 = pneg %p147
        $region50: #{tpu_custom_call.1} parent=47 // pred_check_branch
          %1866 = sbr.rel (%p1864) target = $region52
        $region51: #{tpu_custom_call.1} parent=47 // pred_region
          %s1867 = smul.u32 8, %s25
          %p1868 = scmp.lt.s32.totalorder %s24, 1
          %s1869 = scalar_select %p1868, %s24, 1
          %p1870 = scmp.lt.s32.totalorder %s1867, 7
          %s1871 = scalar_select %p1870, %s1867, 7
          %s1872 = smul.addr %s1869, 8
          %s1873 = sadd.s32 %s1871, %s1872
          %s1874 = smul.addr %s1873, 8
          %s1875 = scalar_lea.vmem %s4, %s1874
        $region52: #{tpu_custom_call.1} parent=47 // pred_fallthru
          _
      $region48: #{tpu_custom_call.1} parent=5 // pred_fallthru
        _
    $region6: #{tpu_custom_call.1} parent=1 // loop_footer
      %s17 = sadd.s32 1, %s13
    $region7: #{tpu_custom_call.1} parent=1 // loop_footer_branch
      %12 = sbr.rel target = $region3
    $region8: #{tpu_custom_call.1} parent=1 // loop_exit
      _
    %1876 = vsyncpa [#allocation3], 1
    %s1877 = scalar_lea.sflag [#allocation3], 1
    %1878 = vsyncpa %s1877, 1

</llo_original>
